<compile_context>
chip_gen: v7x
topology: tpu7x:2x2x1
jax: 0.10.0
libtpu: 0.0.40
codegen_flags: <defaults>
</compile_context>

<pallas_src>
import functools

import jax
import jax.numpy as jnp
from jax.experimental import pallas as pl
from jax.experimental.pallas import tpu as pltpu


def _fc_snn_kernel(spk_ref, win_ref, wh1_ref, wh2_ref,
                   spk_out_ref, mem_out_ref,
                   *, steps, beta, threshold):
    """One batch tile: fused 3-layer IF recurrence over all time steps."""
    tb = spk_out_ref.shape[0]
    n_h0 = win_ref.shape[1]
    n_h1 = wh1_ref.shape[1]
    n_y = wh2_ref.shape[1]

    # Loop-invariant weight tiles (kept f32 so threshold comparisons are exact).
    # TODO(synk): at scaled hidden dims cast to bf16 for MXU throughput.
    w_in = win_ref[...]
    w_h1 = wh1_ref[...]
    w_h2 = wh2_ref[...]

    # Hoisted layer-0 matmul for ALL time steps at once: the Poisson spikes arrive
    # pre-stacked as (steps*tb, n_x) with rows ordered (step, batch), so one big
    # MXU matmul replaces `steps` tiny M=tb matmuls.
    spk_x = spk_ref[0].astype(jnp.float32)                         # (steps*tb, n_x)
    curin_all = jnp.dot(spk_x, w_in, preferred_element_type=jnp.float32)

    def if_step(cur, mem_prev):
        # snntorch.Leaky, reset_mechanism="subtract", strict '>' threshold.
        reset = (mem_prev > threshold).astype(jnp.float32)
        if beta == 0.0:                  # trace-time specialization (beta is a Python float)
            mem_new = cur - reset * threshold
        else:
            mem_new = beta * mem_prev + cur - reset * threshold
        spk = (mem_new > threshold).astype(jnp.float32)
        return spk, mem_new

    # reset_mem(): membranes start at zero (carried as values, no scratch needed).
    memin = jnp.zeros((tb, n_h0), jnp.float32)
    memh1 = jnp.zeros((tb, n_h1), jnp.float32)
    memh2 = jnp.zeros((tb, n_y), jnp.float32)

    spk_cols = []
    mem_cols = []
    # `steps` is small and static -> Python unroll keeps state in registers.
    # TODO(synk): for very large `steps`, switch to lax.fori_loop with a VMEM
    # scratch slab to bound trace/compile size.
    for t in range(steps):
        curin = curin_all[t * tb:(t + 1) * tb, :]                  # this step's layer-0 currents
        spkin, memin = if_step(curin, memin)

        curh1 = jnp.dot(spkin, w_h1, preferred_element_type=jnp.float32)
        spkh1, memh1 = if_step(curh1, memh1)

        curh2 = jnp.dot(spkh1, w_h2, preferred_element_type=jnp.float32)
        spkh2, memh2 = if_step(curh2, memh2)

        spk_cols.append(spkh2)
        mem_cols.append(memh2)

    # Assemble lane-dense (tb, steps*n_y) slabs once and issue a single full-width
    # store per output (no per-step masked 16-lane stores).
    spk_out_ref[...] = jnp.concatenate(spk_cols, axis=1)
    mem_out_ref[...] = jnp.concatenate(mem_cols, axis=1)


def _pick_batch_tile(B, min_grid=2):
    """Largest batch tile that divides B, is sublane-friendly, and (when possible)
    leaves >= `min_grid` grid steps so both v7x TensorCores get work."""
    if B <= 8:
        return B
    for cand in (256, 128, 64, 32, 16, 8):
        if B % cand == 0 and B // cand >= min_grid:
            return cand
    for cand in (256, 128, 64, 32, 16, 8):
        if B % cand == 0:
            return cand
    return B


def fc_snn_forward(x, w_in, w_h1, w_h2, *, steps, rate,
                   beta=0.0, threshold=1.0, key=None):
    """x: (B, ...) flattened to (B, n_x). Weights in PyTorch (out, in) layout, bias-free.

    Returns (out_spikes, out_mem), each (steps, B, n_y), matching FC_SNN.forward.
    """
    B = x.shape[0]
    x2d = x.reshape(B, -1).astype(jnp.float32)
    n_x = x2d.shape[1]
    n_h0, n_h1, n_y = w_in.shape[0], w_h1.shape[0], w_h2.shape[0]
    scale = float(rate) / float(steps)

    # Pre-transpose weights to (in, out) so the kernel computes act @ W^T.
    win_t = jnp.asarray(w_in, jnp.float32).T
    wh1_t = jnp.asarray(w_h1, jnp.float32).T
    wh2_t = jnp.asarray(w_h2, jnp.float32).T

    tb = _pick_batch_tile(B)
    nb = B // tb

    # Poisson rate encoding (time-independent -> hoisted out of the kernel loop):
    # spikes = (U[0,1) < x * rate/steps), identical to `to_poisson_spikes`.
    # Laid out per batch tile as a (steps*tb, n_x) slab, rows ordered (step, batch),
    # so the kernel needs no in-kernel reshape; streamed as bf16 (exact for {0,1}).
    if key is None:
        key = jax.random.PRNGKey(0)
    u = jax.random.uniform(key, (nb, steps, tb, n_x), dtype=jnp.float32)
    probs = (x2d * scale).reshape(nb, 1, tb, n_x)
    spikes_in = (u < probs).astype(jnp.bfloat16).reshape(nb, steps * tb, n_x)

    kernel = functools.partial(_fc_snn_kernel, steps=int(steps), beta=float(beta),
                               threshold=float(threshold))

    # VMEM budget: BlockSpec double-buffers every block; raise the scoped default
    # (16 MiB on v5e, 32 MiB on v6e/v7x) with headroom once tiles outgrow it.
    est_block_bytes = 2 * (steps * tb * n_x * 2                    # bf16 spike slab
                           + 2 * tb * steps * n_y * 4              # spk + mem out slabs
                           + (n_x * n_h0 + n_h0 * n_h1 + n_h1 * n_y) * 4)
    cp_kwargs = dict(dimension_semantics=("parallel",))
    if est_block_bytes > 16 * 1024 * 1024:
        cp_kwargs["vmem_limit_bytes"] = min(int(est_block_bytes * 1.5), 120 * 1024 * 1024)
    # TODO(synk): at scaled hidden dims add pipeline_mode=pl.Buffered(1) on the
    # constant-index weight specs and/or tile the weight N-dim (v7x has 64 MiB VMEM).

    spk2d, mem2d = pl.pallas_call(
        kernel,
        out_shape=(
            jax.ShapeDtypeStruct((B, steps * n_y), jnp.float32),
            jax.ShapeDtypeStruct((B, steps * n_y), jnp.float32),
        ),
        grid_spec=pltpu.PrefetchScalarGridSpec(
            num_scalar_prefetch=0,
            grid=(nb,),                                            # independent batch tiles
            in_specs=[
                pl.BlockSpec((1, steps * tb, n_x), lambda i: (i, 0, 0)),  # Poisson spikes
                pl.BlockSpec((n_x, n_h0), lambda i: (0, 0)),              # W_in^T
                pl.BlockSpec((n_h0, n_h1), lambda i: (0, 0)),             # W_h1^T
                pl.BlockSpec((n_h1, n_y), lambda i: (0, 0)),              # W_h2^T
            ],
            out_specs=[
                pl.BlockSpec((tb, steps * n_y), lambda i: (i, 0)),
                pl.BlockSpec((tb, steps * n_y), lambda i: (i, 0)),
            ],
        ),
        compiler_params=pltpu.CompilerParams(**cp_kwargs),
    )(spikes_in, win_t, wh1_t, wh2_t)

    # (B, steps*n_y) lane-dense slab -> (steps, B, n_y) to match FC_SNN.forward.
    # TODO(synk): at scale keep consumers on (B, steps, n_y) (or emit (steps, B, n_y)
    # directly from the kernel) to skip this extra HBM round trip.
    out_spikes = spk2d.reshape(B, steps, n_y).transpose(1, 0, 2)
    out_mem = mem2d.reshape(B, steps, n_y).transpose(1, 0, 2)
    return out_spikes, out_mem


def _init_linear_weight(key, out_features, in_features):
    # PyTorch nn.Linear default init: U(-1/sqrt(fan_in), +1/sqrt(fan_in)), bias=False.
    bound = 1.0 / float(in_features) ** 0.5
    return jax.random.uniform(key, (out_features, in_features),
                              dtype=jnp.float32, minval=-bound, maxval=bound)


if __name__ == "__main__":
    # Small shapes consistent with the module: image (B, C, H, W) = (2, 4, 16, 16)
    # -> n_x = 1024, hidden widths 32, 16 output neurons, 8 time steps.
    B, C, H, W = 2, 4, 16, 16
    n_x = C * H * W
    n_h = [32, 32]
    n_y = 16
    steps = 8
    rate = 200

    root = jax.random.PRNGKey(0)
    k_x, k_w0, k_w1, k_w2, k_poisson = jax.random.split(root, 5)

    x = jax.random.uniform(k_x, (B, C, H, W), dtype=jnp.float32)   # [0,1) pixel-like
    w_in = _init_linear_weight(k_w0, n_h[0], n_x)
    w_h1 = _init_linear_weight(k_w1, n_h[1], n_h[0])
    w_h2 = _init_linear_weight(k_w2, n_y, n_h[1])

    out_spikes, out_mem = fc_snn_forward(
        x, w_in, w_h1, w_h2, steps=steps, rate=rate,
        beta=0.0, threshold=1.0, key=k_poisson)

    jax.block_until_ready((out_spikes, out_mem))
    assert out_spikes.shape == (steps, B, n_y)
    assert out_mem.shape == (steps, B, n_y)
    # Spikes must be binary; membranes finite.
    assert bool(jnp.all((out_spikes == 0.0) | (out_spikes == 1.0)))
    assert bool(jnp.all(jnp.isfinite(out_mem)))
    print("KERNEL_OK")
</pallas_src>

<mosaic_0001>
module attributes {stable_mosaic.version = 11 : i64} {
  func.func @_fc_snn_kernel(%arg0: i32, %arg1: memref<1x16x1024xbf16, #tpu.memory_space<vmem>>, %arg2: memref<1024x32xf32, #tpu.memory_space<vmem>>, %arg3: memref<32x32xf32, #tpu.memory_space<vmem>>, %arg4: memref<32x16xf32, #tpu.memory_space<vmem>>, %arg5: memref<2x128xf32, #tpu.memory_space<vmem>>, %arg6: memref<2x128xf32, #tpu.memory_space<vmem>>) attributes {dimension_semantics = [#tpu.dimension_semantics<parallel>], iteration_bounds = array<i64: 1>, scalar_prefetch = 0 : i64, scratch_operands = 0 : i64, tpu.core_type = #tpu.core_type<tc>, window_params = [{transform_indices = @transform_0, window_bounds = array<i64: 1, 16, 1024>}, {pipeline_mode = #tpu.pipeline_mode<synchronous>, transform_indices = @transform_1, window_bounds = array<i64: 1024, 32>}, {pipeline_mode = #tpu.pipeline_mode<synchronous>, transform_indices = @transform_2, window_bounds = array<i64: 32, 32>}, {pipeline_mode = #tpu.pipeline_mode<synchronous>, transform_indices = @transform_3, window_bounds = array<i64: 32, 16>}, {transform_indices = @transform_4, window_bounds = array<i64: 2, 128>}, {transform_indices = @transform_5, window_bounds = array<i64: 2, 128>}]} {
    %c0 = arith.constant 0 : index
    %c0_0 = arith.constant 0 : index
    %0 = vector.load %arg2[%c0, %c0_0] : memref<1024x32xf32, #tpu.memory_space<vmem>>, vector<1024x32xf32>
    %c0_1 = arith.constant 0 : index
    %c0_2 = arith.constant 0 : index
    %1 = vector.load %arg3[%c0_1, %c0_2] : memref<32x32xf32, #tpu.memory_space<vmem>>, vector<32x32xf32>
    %c0_3 = arith.constant 0 : index
    %c0_4 = arith.constant 0 : index
    %2 = vector.load %arg4[%c0_3, %c0_4] : memref<32x16xf32, #tpu.memory_space<vmem>>, vector<32x16xf32>
    %c0_5 = arith.constant 0 : index
    %c0_6 = arith.constant 0 : index
    %c0_7 = arith.constant 0 : index
    %3 = vector.load %arg1[%c0_5, %c0_6, %c0_7] : memref<1x16x1024xbf16, #tpu.memory_space<vmem>>, vector<1x16x1024xbf16>
    %4 = vector.shape_cast %3 : vector<1x16x1024xbf16> to vector<16x1024xbf16>
    %5 = arith.extf %4 : vector<16x1024xbf16> to vector<16x1024xf32>
    %cst = arith.constant dense<0.000000e+00> : vector<16x32xf32>
    %6 = tpu.matmul %5, %0, %cst {dimension_numbers = #tpu.dot_dimension_numbers<[1], [0], [0], [1], [0, 0, 1, 1], [], []>} : vector<16x1024xf32>, vector<1024x32xf32>, vector<16x32xf32> -> vector<16x32xf32>
    %cst_8 = arith.constant 0.000000e+00 : f32
    %7 = vector.broadcast %cst_8 : f32 to vector<2x32xf32>
    %cst_9 = arith.constant 0.000000e+00 : f32
    %8 = vector.broadcast %cst_9 : f32 to vector<2x32xf32>
    %cst_10 = arith.constant 0.000000e+00 : f32
    %9 = vector.broadcast %cst_10 : f32 to vector<2x16xf32>
    %10 = vector.extract_strided_slice %6 {offsets = [0, 0], sizes = [2, 32], strides = [1, 1]} : vector<16x32xf32> to vector<2x32xf32>
    %cst_11 = arith.constant 1.000000e+00 : f32
    %11 = vector.broadcast %cst_11 : f32 to vector<2x32xf32>
    %12 = arith.cmpf ogt, %7, %11 : vector<2x32xf32>
    %13 = arith.extui %12 : vector<2x32xi1> to vector<2x32xi32>
    %14 = arith.sitofp %13 : vector<2x32xi32> to vector<2x32xf32>
    %cst_12 = arith.constant 1.000000e+00 : f32
    %15 = vector.broadcast %cst_12 : f32 to vector<2x32xf32>
    %16 = arith.mulf %14, %15 : vector<2x32xf32>
    %17 = arith.subf %10, %16 : vector<2x32xf32>
    %cst_13 = arith.constant 1.000000e+00 : f32
    %18 = vector.broadcast %cst_13 : f32 to vector<2x32xf32>
    %19 = arith.cmpf ogt, %17, %18 : vector<2x32xf32>
    %20 = arith.extui %19 : vector<2x32xi1> to vector<2x32xi32>
    %21 = arith.sitofp %20 : vector<2x32xi32> to vector<2x32xf32>
    %cst_14 = arith.constant dense<0.000000e+00> : vector<2x32xf32>
    %22 = tpu.matmul %21, %1, %cst_14 {dimension_numbers = #tpu.dot_dimension_numbers<[1], [0], [0], [1], [0, 0, 1, 1], [], []>} : vector<2x32xf32>, vector<32x32xf32>, vector<2x32xf32> -> vector<2x32xf32>
    %cst_15 = arith.constant 1.000000e+00 : f32
    %23 = vector.broadcast %cst_15 : f32 to vector<2x32xf32>
    %24 = arith.cmpf ogt, %8, %23 : vector<2x32xf32>
    %25 = arith.extui %24 : vector<2x32xi1> to vector<2x32xi32>
    %26 = arith.sitofp %25 : vector<2x32xi32> to vector<2x32xf32>
    %cst_16 = arith.constant 1.000000e+00 : f32
    %27 = vector.broadcast %cst_16 : f32 to vector<2x32xf32>
    %28 = arith.mulf %26, %27 : vector<2x32xf32>
    %29 = arith.subf %22, %28 : vector<2x32xf32>
    %cst_17 = arith.constant 1.000000e+00 : f32
    %30 = vector.broadcast %cst_17 : f32 to vector<2x32xf32>
    %31 = arith.cmpf ogt, %29, %30 : vector<2x32xf32>
    %32 = arith.extui %31 : vector<2x32xi1> to vector<2x32xi32>
    %33 = arith.sitofp %32 : vector<2x32xi32> to vector<2x32xf32>
    %cst_18 = arith.constant dense<0.000000e+00> : vector<2x16xf32>
    %34 = tpu.matmul %33, %2, %cst_18 {dimension_numbers = #tpu.dot_dimension_numbers<[1], [0], [0], [1], [0, 0, 1, 1], [], []>} : vector<2x32xf32>, vector<32x16xf32>, vector<2x16xf32> -> vector<2x16xf32>
    %cst_19 = arith.constant 1.000000e+00 : f32
    %35 = vector.broadcast %cst_19 : f32 to vector<2x16xf32>
    %36 = arith.cmpf ogt, %9, %35 : vector<2x16xf32>
    %37 = arith.extui %36 : vector<2x16xi1> to vector<2x16xi32>
    %38 = arith.sitofp %37 : vector<2x16xi32> to vector<2x16xf32>
    %cst_20 = arith.constant 1.000000e+00 : f32
    %39 = vector.broadcast %cst_20 : f32 to vector<2x16xf32>
    %40 = arith.mulf %38, %39 : vector<2x16xf32>
    %41 = arith.subf %34, %40 : vector<2x16xf32>
    %cst_21 = arith.constant 1.000000e+00 : f32
    %42 = vector.broadcast %cst_21 : f32 to vector<2x16xf32>
    %43 = arith.cmpf ogt, %41, %42 : vector<2x16xf32>
    %44 = arith.extui %43 : vector<2x16xi1> to vector<2x16xi32>
    %45 = arith.sitofp %44 : vector<2x16xi32> to vector<2x16xf32>
    %46 = vector.extract_strided_slice %6 {offsets = [2, 0], sizes = [2, 32], strides = [1, 1]} : vector<16x32xf32> to vector<2x32xf32>
    %cst_22 = arith.constant 1.000000e+00 : f32
    %47 = vector.broadcast %cst_22 : f32 to vector<2x32xf32>
    %48 = arith.cmpf ogt, %17, %47 : vector<2x32xf32>
    %49 = arith.extui %48 : vector<2x32xi1> to vector<2x32xi32>
    %50 = arith.sitofp %49 : vector<2x32xi32> to vector<2x32xf32>
    %cst_23 = arith.constant 1.000000e+00 : f32
    %51 = vector.broadcast %cst_23 : f32 to vector<2x32xf32>
    %52 = arith.mulf %50, %51 : vector<2x32xf32>
    %53 = arith.subf %46, %52 : vector<2x32xf32>
    %cst_24 = arith.constant 1.000000e+00 : f32
    %54 = vector.broadcast %cst_24 : f32 to vector<2x32xf32>
    %55 = arith.cmpf ogt, %53, %54 : vector<2x32xf32>
    %56 = arith.extui %55 : vector<2x32xi1> to vector<2x32xi32>
    %57 = arith.sitofp %56 : vector<2x32xi32> to vector<2x32xf32>
    %cst_25 = arith.constant dense<0.000000e+00> : vector<2x32xf32>
    %58 = tpu.matmul %57, %1, %cst_25 {dimension_numbers = #tpu.dot_dimension_numbers<[1], [0], [0], [1], [0, 0, 1, 1], [], []>} : vector<2x32xf32>, vector<32x32xf32>, vector<2x32xf32> -> vector<2x32xf32>
    %cst_26 = arith.constant 1.000000e+00 : f32
    %59 = vector.broadcast %cst_26 : f32 to vector<2x32xf32>
    %60 = arith.cmpf ogt, %29, %59 : vector<2x32xf32>
    %61 = arith.extui %60 : vector<2x32xi1> to vector<2x32xi32>
    %62 = arith.sitofp %61 : vector<2x32xi32> to vector<2x32xf32>
    %cst_27 = arith.constant 1.000000e+00 : f32
    %63 = vector.broadcast %cst_27 : f32 to vector<2x32xf32>
    %64 = arith.mulf %62, %63 : vector<2x32xf32>
    %65 = arith.subf %58, %64 : vector<2x32xf32>
    %cst_28 = arith.constant 1.000000e+00 : f32
    %66 = vector.broadcast %cst_28 : f32 to vector<2x32xf32>
    %67 = arith.cmpf ogt, %65, %66 : vector<2x32xf32>
    %68 = arith.extui %67 : vector<2x32xi1> to vector<2x32xi32>
    %69 = arith.sitofp %68 : vector<2x32xi32> to vector<2x32xf32>
    %cst_29 = arith.constant dense<0.000000e+00> : vector<2x16xf32>
    %70 = tpu.matmul %69, %2, %cst_29 {dimension_numbers = #tpu.dot_dimension_numbers<[1], [0], [0], [1], [0, 0, 1, 1], [], []>} : vector<2x32xf32>, vector<32x16xf32>, vector<2x16xf32> -> vector<2x16xf32>
    %cst_30 = arith.constant 1.000000e+00 : f32
    %71 = vector.broadcast %cst_30 : f32 to vector<2x16xf32>
    %72 = arith.cmpf ogt, %41, %71 : vector<2x16xf32>
    %73 = arith.extui %72 : vector<2x16xi1> to vector<2x16xi32>
    %74 = arith.sitofp %73 : vector<2x16xi32> to vector<2x16xf32>
    %cst_31 = arith.constant 1.000000e+00 : f32
    %75 = vector.broadcast %cst_31 : f32 to vector<2x16xf32>
    %76 = arith.mulf %74, %75 : vector<2x16xf32>
    %77 = arith.subf %70, %76 : vector<2x16xf32>
    %cst_32 = arith.constant 1.000000e+00 : f32
    %78 = vector.broadcast %cst_32 : f32 to vector<2x16xf32>
    %79 = arith.cmpf ogt, %77, %78 : vector<2x16xf32>
    %80 = arith.extui %79 : vector<2x16xi1> to vector<2x16xi32>
    %81 = arith.sitofp %80 : vector<2x16xi32> to vector<2x16xf32>
    %82 = vector.extract_strided_slice %6 {offsets = [4, 0], sizes = [2, 32], strides = [1, 1]} : vector<16x32xf32> to vector<2x32xf32>
    %cst_33 = arith.constant 1.000000e+00 : f32
    %83 = vector.broadcast %cst_33 : f32 to vector<2x32xf32>
    %84 = arith.cmpf ogt, %53, %83 : vector<2x32xf32>
    %85 = arith.extui %84 : vector<2x32xi1> to vector<2x32xi32>
    %86 = arith.sitofp %85 : vector<2x32xi32> to vector<2x32xf32>
    %cst_34 = arith.constant 1.000000e+00 : f32
    %87 = vector.broadcast %cst_34 : f32 to vector<2x32xf32>
    %88 = arith.mulf %86, %87 : vector<2x32xf32>
    %89 = arith.subf %82, %88 : vector<2x32xf32>
    %cst_35 = arith.constant 1.000000e+00 : f32
    %90 = vector.broadcast %cst_35 : f32 to vector<2x32xf32>
    %91 = arith.cmpf ogt, %89, %90 : vector<2x32xf32>
    %92 = arith.extui %91 : vector<2x32xi1> to vector<2x32xi32>
    %93 = arith.sitofp %92 : vector<2x32xi32> to vector<2x32xf32>
    %cst_36 = arith.constant dense<0.000000e+00> : vector<2x32xf32>
    %94 = tpu.matmul %93, %1, %cst_36 {dimension_numbers = #tpu.dot_dimension_numbers<[1], [0], [0], [1], [0, 0, 1, 1], [], []>} : vector<2x32xf32>, vector<32x32xf32>, vector<2x32xf32> -> vector<2x32xf32>
    %cst_37 = arith.constant 1.000000e+00 : f32
    %95 = vector.broadcast %cst_37 : f32 to vector<2x32xf32>
    %96 = arith.cmpf ogt, %65, %95 : vector<2x32xf32>
    %97 = arith.extui %96 : vector<2x32xi1> to vector<2x32xi32>
    %98 = arith.sitofp %97 : vector<2x32xi32> to vector<2x32xf32>
    %cst_38 = arith.constant 1.000000e+00 : f32
    %99 = vector.broadcast %cst_38 : f32 to vector<2x32xf32>
    %100 = arith.mulf %98, %99 : vector<2x32xf32>
    %101 = arith.subf %94, %100 : vector<2x32xf32>
    %cst_39 = arith.constant 1.000000e+00 : f32
    %102 = vector.broadcast %cst_39 : f32 to vector<2x32xf32>
    %103 = arith.cmpf ogt, %101, %102 : vector<2x32xf32>
    %104 = arith.extui %103 : vector<2x32xi1> to vector<2x32xi32>
    %105 = arith.sitofp %104 : vector<2x32xi32> to vector<2x32xf32>
    %cst_40 = arith.constant dense<0.000000e+00> : vector<2x16xf32>
    %106 = tpu.matmul %105, %2, %cst_40 {dimension_numbers = #tpu.dot_dimension_numbers<[1], [0], [0], [1], [0, 0, 1, 1], [], []>} : vector<2x32xf32>, vector<32x16xf32>, vector<2x16xf32> -> vector<2x16xf32>
    %cst_41 = arith.constant 1.000000e+00 : f32
    %107 = vector.broadcast %cst_41 : f32 to vector<2x16xf32>
    %108 = arith.cmpf ogt, %77, %107 : vector<2x16xf32>
    %109 = arith.extui %108 : vector<2x16xi1> to vector<2x16xi32>
    %110 = arith.sitofp %109 : vector<2x16xi32> to vector<2x16xf32>
    %cst_42 = arith.constant 1.000000e+00 : f32
    %111 = vector.broadcast %cst_42 : f32 to vector<2x16xf32>
    %112 = arith.mulf %110, %111 : vector<2x16xf32>
    %113 = arith.subf %106, %112 : vector<2x16xf32>
    %cst_43 = arith.constant 1.000000e+00 : f32
    %114 = vector.broadcast %cst_43 : f32 to vector<2x16xf32>
    %115 = arith.cmpf ogt, %113, %114 : vector<2x16xf32>
    %116 = arith.extui %115 : vector<2x16xi1> to vector<2x16xi32>
    %117 = arith.sitofp %116 : vector<2x16xi32> to vector<2x16xf32>
    %118 = vector.extract_strided_slice %6 {offsets = [6, 0], sizes = [2, 32], strides = [1, 1]} : vector<16x32xf32> to vector<2x32xf32>
    %cst_44 = arith.constant 1.000000e+00 : f32
    %119 = vector.broadcast %cst_44 : f32 to vector<2x32xf32>
    %120 = arith.cmpf ogt, %89, %119 : vector<2x32xf32>
    %121 = arith.extui %120 : vector<2x32xi1> to vector<2x32xi32>
    %122 = arith.sitofp %121 : vector<2x32xi32> to vector<2x32xf32>
    %cst_45 = arith.constant 1.000000e+00 : f32
    %123 = vector.broadcast %cst_45 : f32 to vector<2x32xf32>
    %124 = arith.mulf %122, %123 : vector<2x32xf32>
    %125 = arith.subf %118, %124 : vector<2x32xf32>
    %cst_46 = arith.constant 1.000000e+00 : f32
    %126 = vector.broadcast %cst_46 : f32 to vector<2x32xf32>
    %127 = arith.cmpf ogt, %125, %126 : vector<2x32xf32>
    %128 = arith.extui %127 : vector<2x32xi1> to vector<2x32xi32>
    %129 = arith.sitofp %128 : vector<2x32xi32> to vector<2x32xf32>
    %cst_47 = arith.constant dense<0.000000e+00> : vector<2x32xf32>
    %130 = tpu.matmul %129, %1, %cst_47 {dimension_numbers = #tpu.dot_dimension_numbers<[1], [0], [0], [1], [0, 0, 1, 1], [], []>} : vector<2x32xf32>, vector<32x32xf32>, vector<2x32xf32> -> vector<2x32xf32>
    %cst_48 = arith.constant 1.000000e+00 : f32
    %131 = vector.broadcast %cst_48 : f32 to vector<2x32xf32>
    %132 = arith.cmpf ogt, %101, %131 : vector<2x32xf32>
    %133 = arith.extui %132 : vector<2x32xi1> to vector<2x32xi32>
    %134 = arith.sitofp %133 : vector<2x32xi32> to vector<2x32xf32>
    %cst_49 = arith.constant 1.000000e+00 : f32
    %135 = vector.broadcast %cst_49 : f32 to vector<2x32xf32>
    %136 = arith.mulf %134, %135 : vector<2x32xf32>
    %137 = arith.subf %130, %136 : vector<2x32xf32>
    %cst_50 = arith.constant 1.000000e+00 : f32
    %138 = vector.broadcast %cst_50 : f32 to vector<2x32xf32>
    %139 = arith.cmpf ogt, %137, %138 : vector<2x32xf32>
    %140 = arith.extui %139 : vector<2x32xi1> to vector<2x32xi32>
    %141 = arith.sitofp %140 : vector<2x32xi32> to vector<2x32xf32>
    %cst_51 = arith.constant dense<0.000000e+00> : vector<2x16xf32>
    %142 = tpu.matmul %141, %2, %cst_51 {dimension_numbers = #tpu.dot_dimension_numbers<[1], [0], [0], [1], [0, 0, 1, 1], [], []>} : vector<2x32xf32>, vector<32x16xf32>, vector<2x16xf32> -> vector<2x16xf32>
    %cst_52 = arith.constant 1.000000e+00 : f32
    %143 = vector.broadcast %cst_52 : f32 to vector<2x16xf32>
    %144 = arith.cmpf ogt, %113, %143 : vector<2x16xf32>
    %145 = arith.extui %144 : vector<2x16xi1> to vector<2x16xi32>
    %146 = arith.sitofp %145 : vector<2x16xi32> to vector<2x16xf32>
    %cst_53 = arith.constant 1.000000e+00 : f32
    %147 = vector.broadcast %cst_53 : f32 to vector<2x16xf32>
    %148 = arith.mulf %146, %147 : vector<2x16xf32>
    %149 = arith.subf %142, %148 : vector<2x16xf32>
    %cst_54 = arith.constant 1.000000e+00 : f32
    %150 = vector.broadcast %cst_54 : f32 to vector<2x16xf32>
    %151 = arith.cmpf ogt, %149, %150 : vector<2x16xf32>
    %152 = arith.extui %151 : vector<2x16xi1> to vector<2x16xi32>
    %153 = arith.sitofp %152 : vector<2x16xi32> to vector<2x16xf32>
    %154 = vector.extract_strided_slice %6 {offsets = [8, 0], sizes = [2, 32], strides = [1, 1]} : vector<16x32xf32> to vector<2x32xf32>
    %cst_55 = arith.constant 1.000000e+00 : f32
    %155 = vector.broadcast %cst_55 : f32 to vector<2x32xf32>
    %156 = arith.cmpf ogt, %125, %155 : vector<2x32xf32>
    %157 = arith.extui %156 : vector<2x32xi1> to vector<2x32xi32>
    %158 = arith.sitofp %157 : vector<2x32xi32> to vector<2x32xf32>
    %cst_56 = arith.constant 1.000000e+00 : f32
    %159 = vector.broadcast %cst_56 : f32 to vector<2x32xf32>
    %160 = arith.mulf %158, %159 : vector<2x32xf32>
    %161 = arith.subf %154, %160 : vector<2x32xf32>
    %cst_57 = arith.constant 1.000000e+00 : f32
    %162 = vector.broadcast %cst_57 : f32 to vector<2x32xf32>
    %163 = arith.cmpf ogt, %161, %162 : vector<2x32xf32>
    %164 = arith.extui %163 : vector<2x32xi1> to vector<2x32xi32>
    %165 = arith.sitofp %164 : vector<2x32xi32> to vector<2x32xf32>
    %cst_58 = arith.constant dense<0.000000e+00> : vector<2x32xf32>
    %166 = tpu.matmul %165, %1, %cst_58 {dimension_numbers = #tpu.dot_dimension_numbers<[1], [0], [0], [1], [0, 0, 1, 1], [], []>} : vector<2x32xf32>, vector<32x32xf32>, vector<2x32xf32> -> vector<2x32xf32>
    %cst_59 = arith.constant 1.000000e+00 : f32
    %167 = vector.broadcast %cst_59 : f32 to vector<2x32xf32>
    %168 = arith.cmpf ogt, %137, %167 : vector<2x32xf32>
    %169 = arith.extui %168 : vector<2x32xi1> to vector<2x32xi32>
    %170 = arith.sitofp %169 : vector<2x32xi32> to vector<2x32xf32>
    %cst_60 = arith.constant 1.000000e+00 : f32
    %171 = vector.broadcast %cst_60 : f32 to vector<2x32xf32>
    %172 = arith.mulf %170, %171 : vector<2x32xf32>
    %173 = arith.subf %166, %172 : vector<2x32xf32>
    %cst_61 = arith.constant 1.000000e+00 : f32
    %174 = vector.broadcast %cst_61 : f32 to vector<2x32xf32>
    %175 = arith.cmpf ogt, %173, %174 : vector<2x32xf32>
    %176 = arith.extui %175 : vector<2x32xi1> to vector<2x32xi32>
    %177 = arith.sitofp %176 : vector<2x32xi32> to vector<2x32xf32>
    %cst_62 = arith.constant dense<0.000000e+00> : vector<2x16xf32>
    %178 = tpu.matmul %177, %2, %cst_62 {dimension_numbers = #tpu.dot_dimension_numbers<[1], [0], [0], [1], [0, 0, 1, 1], [], []>} : vector<2x32xf32>, vector<32x16xf32>, vector<2x16xf32> -> vector<2x16xf32>
    %cst_63 = arith.constant 1.000000e+00 : f32
    %179 = vector.broadcast %cst_63 : f32 to vector<2x16xf32>
    %180 = arith.cmpf ogt, %149, %179 : vector<2x16xf32>
    %181 = arith.extui %180 : vector<2x16xi1> to vector<2x16xi32>
    %182 = arith.sitofp %181 : vector<2x16xi32> to vector<2x16xf32>
    %cst_64 = arith.constant 1.000000e+00 : f32
    %183 = vector.broadcast %cst_64 : f32 to vector<2x16xf32>
    %184 = arith.mulf %182, %183 : vector<2x16xf32>
    %185 = arith.subf %178, %184 : vector<2x16xf32>
    %cst_65 = arith.constant 1.000000e+00 : f32
    %186 = vector.broadcast %cst_65 : f32 to vector<2x16xf32>
    %187 = arith.cmpf ogt, %185, %186 : vector<2x16xf32>
    %188 = arith.extui %187 : vector<2x16xi1> to vector<2x16xi32>
    %189 = arith.sitofp %188 : vector<2x16xi32> to vector<2x16xf32>
    %190 = vector.extract_strided_slice %6 {offsets = [10, 0], sizes = [2, 32], strides = [1, 1]} : vector<16x32xf32> to vector<2x32xf32>
    %cst_66 = arith.constant 1.000000e+00 : f32
    %191 = vector.broadcast %cst_66 : f32 to vector<2x32xf32>
    %192 = arith.cmpf ogt, %161, %191 : vector<2x32xf32>
    %193 = arith.extui %192 : vector<2x32xi1> to vector<2x32xi32>
    %194 = arith.sitofp %193 : vector<2x32xi32> to vector<2x32xf32>
    %cst_67 = arith.constant 1.000000e+00 : f32
    %195 = vector.broadcast %cst_67 : f32 to vector<2x32xf32>
    %196 = arith.mulf %194, %195 : vector<2x32xf32>
    %197 = arith.subf %190, %196 : vector<2x32xf32>
    %cst_68 = arith.constant 1.000000e+00 : f32
    %198 = vector.broadcast %cst_68 : f32 to vector<2x32xf32>
    %199 = arith.cmpf ogt, %197, %198 : vector<2x32xf32>
    %200 = arith.extui %199 : vector<2x32xi1> to vector<2x32xi32>
    %201 = arith.sitofp %200 : vector<2x32xi32> to vector<2x32xf32>
    %cst_69 = arith.constant dense<0.000000e+00> : vector<2x32xf32>
    %202 = tpu.matmul %201, %1, %cst_69 {dimension_numbers = #tpu.dot_dimension_numbers<[1], [0], [0], [1], [0, 0, 1, 1], [], []>} : vector<2x32xf32>, vector<32x32xf32>, vector<2x32xf32> -> vector<2x32xf32>
    %cst_70 = arith.constant 1.000000e+00 : f32
    %203 = vector.broadcast %cst_70 : f32 to vector<2x32xf32>
    %204 = arith.cmpf ogt, %173, %203 : vector<2x32xf32>
    %205 = arith.extui %204 : vector<2x32xi1> to vector<2x32xi32>
    %206 = arith.sitofp %205 : vector<2x32xi32> to vector<2x32xf32>
    %cst_71 = arith.constant 1.000000e+00 : f32
    %207 = vector.broadcast %cst_71 : f32 to vector<2x32xf32>
    %208 = arith.mulf %206, %207 : vector<2x32xf32>
    %209 = arith.subf %202, %208 : vector<2x32xf32>
    %cst_72 = arith.constant 1.000000e+00 : f32
    %210 = vector.broadcast %cst_72 : f32 to vector<2x32xf32>
    %211 = arith.cmpf ogt, %209, %210 : vector<2x32xf32>
    %212 = arith.extui %211 : vector<2x32xi1> to vector<2x32xi32>
    %213 = arith.sitofp %212 : vector<2x32xi32> to vector<2x32xf32>
    %cst_73 = arith.constant dense<0.000000e+00> : vector<2x16xf32>
    %214 = tpu.matmul %213, %2, %cst_73 {dimension_numbers = #tpu.dot_dimension_numbers<[1], [0], [0], [1], [0, 0, 1, 1], [], []>} : vector<2x32xf32>, vector<32x16xf32>, vector<2x16xf32> -> vector<2x16xf32>
    %cst_74 = arith.constant 1.000000e+00 : f32
    %215 = vector.broadcast %cst_74 : f32 to vector<2x16xf32>
    %216 = arith.cmpf ogt, %185, %215 : vector<2x16xf32>
    %217 = arith.extui %216 : vector<2x16xi1> to vector<2x16xi32>
    %218 = arith.sitofp %217 : vector<2x16xi32> to vector<2x16xf32>
    %cst_75 = arith.constant 1.000000e+00 : f32
    %219 = vector.broadcast %cst_75 : f32 to vector<2x16xf32>
    %220 = arith.mulf %218, %219 : vector<2x16xf32>
    %221 = arith.subf %214, %220 : vector<2x16xf32>
    %cst_76 = arith.constant 1.000000e+00 : f32
    %222 = vector.broadcast %cst_76 : f32 to vector<2x16xf32>
    %223 = arith.cmpf ogt, %221, %222 : vector<2x16xf32>
    %224 = arith.extui %223 : vector<2x16xi1> to vector<2x16xi32>
    %225 = arith.sitofp %224 : vector<2x16xi32> to vector<2x16xf32>
    %226 = vector.extract_strided_slice %6 {offsets = [12, 0], sizes = [2, 32], strides = [1, 1]} : vector<16x32xf32> to vector<2x32xf32>
    %cst_77 = arith.constant 1.000000e+00 : f32
    %227 = vector.broadcast %cst_77 : f32 to vector<2x32xf32>
    %228 = arith.cmpf ogt, %197, %227 : vector<2x32xf32>
    %229 = arith.extui %228 : vector<2x32xi1> to vector<2x32xi32>
    %230 = arith.sitofp %229 : vector<2x32xi32> to vector<2x32xf32>
    %cst_78 = arith.constant 1.000000e+00 : f32
    %231 = vector.broadcast %cst_78 : f32 to vector<2x32xf32>
    %232 = arith.mulf %230, %231 : vector<2x32xf32>
    %233 = arith.subf %226, %232 : vector<2x32xf32>
    %cst_79 = arith.constant 1.000000e+00 : f32
    %234 = vector.broadcast %cst_79 : f32 to vector<2x32xf32>
    %235 = arith.cmpf ogt, %233, %234 : vector<2x32xf32>
    %236 = arith.extui %235 : vector<2x32xi1> to vector<2x32xi32>
    %237 = arith.sitofp %236 : vector<2x32xi32> to vector<2x32xf32>
    %cst_80 = arith.constant dense<0.000000e+00> : vector<2x32xf32>
    %238 = tpu.matmul %237, %1, %cst_80 {dimension_numbers = #tpu.dot_dimension_numbers<[1], [0], [0], [1], [0, 0, 1, 1], [], []>} : vector<2x32xf32>, vector<32x32xf32>, vector<2x32xf32> -> vector<2x32xf32>
    %cst_81 = arith.constant 1.000000e+00 : f32
    %239 = vector.broadcast %cst_81 : f32 to vector<2x32xf32>
    %240 = arith.cmpf ogt, %209, %239 : vector<2x32xf32>
    %241 = arith.extui %240 : vector<2x32xi1> to vector<2x32xi32>
    %242 = arith.sitofp %241 : vector<2x32xi32> to vector<2x32xf32>
    %cst_82 = arith.constant 1.000000e+00 : f32
    %243 = vector.broadcast %cst_82 : f32 to vector<2x32xf32>
    %244 = arith.mulf %242, %243 : vector<2x32xf32>
    %245 = arith.subf %238, %244 : vector<2x32xf32>
    %cst_83 = arith.constant 1.000000e+00 : f32
    %246 = vector.broadcast %cst_83 : f32 to vector<2x32xf32>
    %247 = arith.cmpf ogt, %245, %246 : vector<2x32xf32>
    %248 = arith.extui %247 : vector<2x32xi1> to vector<2x32xi32>
    %249 = arith.sitofp %248 : vector<2x32xi32> to vector<2x32xf32>
    %cst_84 = arith.constant dense<0.000000e+00> : vector<2x16xf32>
    %250 = tpu.matmul %249, %2, %cst_84 {dimension_numbers = #tpu.dot_dimension_numbers<[1], [0], [0], [1], [0, 0, 1, 1], [], []>} : vector<2x32xf32>, vector<32x16xf32>, vector<2x16xf32> -> vector<2x16xf32>
    %cst_85 = arith.constant 1.000000e+00 : f32
    %251 = vector.broadcast %cst_85 : f32 to vector<2x16xf32>
    %252 = arith.cmpf ogt, %221, %251 : vector<2x16xf32>
    %253 = arith.extui %252 : vector<2x16xi1> to vector<2x16xi32>
    %254 = arith.sitofp %253 : vector<2x16xi32> to vector<2x16xf32>
    %cst_86 = arith.constant 1.000000e+00 : f32
    %255 = vector.broadcast %cst_86 : f32 to vector<2x16xf32>
    %256 = arith.mulf %254, %255 : vector<2x16xf32>
    %257 = arith.subf %250, %256 : vector<2x16xf32>
    %cst_87 = arith.constant 1.000000e+00 : f32
    %258 = vector.broadcast %cst_87 : f32 to vector<2x16xf32>
    %259 = arith.cmpf ogt, %257, %258 : vector<2x16xf32>
    %260 = arith.extui %259 : vector<2x16xi1> to vector<2x16xi32>
    %261 = arith.sitofp %260 : vector<2x16xi32> to vector<2x16xf32>
    %262 = vector.extract_strided_slice %6 {offsets = [14, 0], sizes = [2, 32], strides = [1, 1]} : vector<16x32xf32> to vector<2x32xf32>
    %cst_88 = arith.constant 1.000000e+00 : f32
    %263 = vector.broadcast %cst_88 : f32 to vector<2x32xf32>
    %264 = arith.cmpf ogt, %233, %263 : vector<2x32xf32>
    %265 = arith.extui %264 : vector<2x32xi1> to vector<2x32xi32>
    %266 = arith.sitofp %265 : vector<2x32xi32> to vector<2x32xf32>
    %cst_89 = arith.constant 1.000000e+00 : f32
    %267 = vector.broadcast %cst_89 : f32 to vector<2x32xf32>
    %268 = arith.mulf %266, %267 : vector<2x32xf32>
    %269 = arith.subf %262, %268 : vector<2x32xf32>
    %cst_90 = arith.constant 1.000000e+00 : f32
    %270 = vector.broadcast %cst_90 : f32 to vector<2x32xf32>
    %271 = arith.cmpf ogt, %269, %270 : vector<2x32xf32>
    %272 = arith.extui %271 : vector<2x32xi1> to vector<2x32xi32>
    %273 = arith.sitofp %272 : vector<2x32xi32> to vector<2x32xf32>
    %cst_91 = arith.constant dense<0.000000e+00> : vector<2x32xf32>
    %274 = tpu.matmul %273, %1, %cst_91 {dimension_numbers = #tpu.dot_dimension_numbers<[1], [0], [0], [1], [0, 0, 1, 1], [], []>} : vector<2x32xf32>, vector<32x32xf32>, vector<2x32xf32> -> vector<2x32xf32>
    %cst_92 = arith.constant 1.000000e+00 : f32
    %275 = vector.broadcast %cst_92 : f32 to vector<2x32xf32>
    %276 = arith.cmpf ogt, %245, %275 : vector<2x32xf32>
    %277 = arith.extui %276 : vector<2x32xi1> to vector<2x32xi32>
    %278 = arith.sitofp %277 : vector<2x32xi32> to vector<2x32xf32>
    %cst_93 = arith.constant 1.000000e+00 : f32
    %279 = vector.broadcast %cst_93 : f32 to vector<2x32xf32>
    %280 = arith.mulf %278, %279 : vector<2x32xf32>
    %281 = arith.subf %274, %280 : vector<2x32xf32>
    %cst_94 = arith.constant 1.000000e+00 : f32
    %282 = vector.broadcast %cst_94 : f32 to vector<2x32xf32>
    %283 = arith.cmpf ogt, %281, %282 : vector<2x32xf32>
    %284 = arith.extui %283 : vector<2x32xi1> to vector<2x32xi32>
    %285 = arith.sitofp %284 : vector<2x32xi32> to vector<2x32xf32>
    %cst_95 = arith.constant dense<0.000000e+00> : vector<2x16xf32>
    %286 = tpu.matmul %285, %2, %cst_95 {dimension_numbers = #tpu.dot_dimension_numbers<[1], [0], [0], [1], [0, 0, 1, 1], [], []>} : vector<2x32xf32>, vector<32x16xf32>, vector<2x16xf32> -> vector<2x16xf32>
    %cst_96 = arith.constant 1.000000e+00 : f32
    %287 = vector.broadcast %cst_96 : f32 to vector<2x16xf32>
    %288 = arith.cmpf ogt, %257, %287 : vector<2x16xf32>
    %289 = arith.extui %288 : vector<2x16xi1> to vector<2x16xi32>
    %290 = arith.sitofp %289 : vector<2x16xi32> to vector<2x16xf32>
    %cst_97 = arith.constant 1.000000e+00 : f32
    %291 = vector.broadcast %cst_97 : f32 to vector<2x16xf32>
    %292 = arith.mulf %290, %291 : vector<2x16xf32>
    %293 = arith.subf %286, %292 : vector<2x16xf32>
    %cst_98 = arith.constant 1.000000e+00 : f32
    %294 = vector.broadcast %cst_98 : f32 to vector<2x16xf32>
    %295 = arith.cmpf ogt, %293, %294 : vector<2x16xf32>
    %296 = arith.extui %295 : vector<2x16xi1> to vector<2x16xi32>
    %297 = arith.sitofp %296 : vector<2x16xi32> to vector<2x16xf32>
    %298 = tpu.concatenate %45, %81, %117, %153, %189, %225, %261, %297 in 1 : vector<2x16xf32>, vector<2x16xf32>, vector<2x16xf32>, vector<2x16xf32>, vector<2x16xf32>, vector<2x16xf32>, vector<2x16xf32>, vector<2x16xf32> -> vector<2x128xf32>
    %c0_99 = arith.constant 0 : index
    %c0_100 = arith.constant 0 : index
    %299 = vector.load %arg5[%c0_99, %c0_100] : memref<2x128xf32, #tpu.memory_space<vmem>>, vector<2x128xf32>
    tpu.vector_store %arg5[%c0_99, %c0_100], %298 {strides = array<i32>} : memref<2x128xf32, #tpu.memory_space<vmem>>, vector<2x128xf32>,
    %300 = tpu.concatenate %41, %77, %113, %149, %185, %221, %257, %293 in 1 : vector<2x16xf32>, vector<2x16xf32>, vector<2x16xf32>, vector<2x16xf32>, vector<2x16xf32>, vector<2x16xf32>, vector<2x16xf32>, vector<2x16xf32> -> vector<2x128xf32>
    %c0_101 = arith.constant 0 : index
    %c0_102 = arith.constant 0 : index
    %301 = vector.load %arg6[%c0_101, %c0_102] : memref<2x128xf32, #tpu.memory_space<vmem>>, vector<2x128xf32>
    tpu.vector_store %arg6[%c0_101, %c0_102], %300 {strides = array<i32>} : memref<2x128xf32, #tpu.memory_space<vmem>>, vector<2x128xf32>,
    return
  }
  func.func @transform_0(%arg0: i32) -> (i32, i32, i32) {
    %c0_i32 = arith.constant 0 : i32
    %c0_i32_0 = arith.constant 0 : i32
    %c0_i32_1 = arith.constant 0 : i32
    return %arg0, %c0_i32, %c0_i32_0 : i32, i32, i32
  }
  func.func @transform_1(%arg0: i32) -> (i32, i32) {
    %c0_i32 = arith.constant 0 : i32
    %c0_i32_0 = arith.constant 0 : i32
    %c0_i32_1 = arith.constant 0 : i32
    return %c0_i32, %c0_i32_0 : i32, i32
  }
  func.func @transform_2(%arg0: i32) -> (i32, i32) {
    %c0_i32 = arith.constant 0 : i32
    %c0_i32_0 = arith.constant 0 : i32
    %c0_i32_1 = arith.constant 0 : i32
    return %c0_i32, %c0_i32_0 : i32, i32
  }
  func.func @transform_3(%arg0: i32) -> (i32, i32) {
    %c0_i32 = arith.constant 0 : i32
    %c0_i32_0 = arith.constant 0 : i32
    %c0_i32_1 = arith.constant 0 : i32
    return %c0_i32, %c0_i32_0 : i32, i32
  }
  func.func @transform_4(%arg0: i32) -> (i32, i32) {
    %c0_i32 = arith.constant 0 : i32
    %c0_i32_0 = arith.constant 0 : i32
    return %arg0, %c0_i32 : i32, i32
  }
  func.func @transform_5(%arg0: i32) -> (i32, i32) {
    %c0_i32 = arith.constant 0 : i32
    %c0_i32_0 = arith.constant 0 : i32
    return %arg0, %c0_i32 : i32, i32
  }
}

</mosaic_0001>

<llo_original>
// kernel: tpu_custom_call.1
$region0: #{tpu_custom_call.1}
  #allocation0 [shape = 'u32[]', space=smem, size = 0x4, offset = 0x4, fixed_abs, tag = 'smem constant byte address 0x4 - core index']
  #allocation1 [shape = 'u32[144,128]{1,0:T(1,128)}', space=vmem, size = 0x12000, scoped, tag = 'internal scratch']
  %s0 = inlined_call_operand.vmem [shape: bf16[1,16,1024], index: 0, kind: input, shape index: {}]
  %s1 = inlined_call_operand.vmem [shape: f32[1024,32], index: 1, kind: input, shape index: {}]
  %s2 = inlined_call_operand.vmem [shape: f32[32,32], index: 2, kind: input, shape index: {}]
  %s3 = inlined_call_operand.vmem [shape: f32[32,16], index: 3, kind: input, shape index: {}]
  %s4 = inlined_call_operand.hbm [shape: f32[2,128], index: 4, kind: output, shape index: {0}]
  %s5 = inlined_call_operand.hbm [shape: f32[2,128], index: 5, kind: output, shape index: {1}]
  %6 = xla_tuple %s4, %s5
  %s7 = sld [smem:[#allocation0]]
  $region34: #{tpu_custom_call.1} parent=0
    _
  %s9 = ssub.s32 1, %s7
  %s10 = scalar_select 0, %s9, %s7
  $region1: #{tpu_custom_call.1} parent=0
    #allocation2 [shape = 'u8[1024]{0}', space=vmem, size = 0x400, scoped, tag = 'output window, operand 0, single buffered']
    #allocation3 [shape = 's32[1]{0}', space=sflag, size = 0x4, scoped, tag = 'scoped memory for tpu_custom_call.1']
    #allocation4 [shape = 'u8[1024]{0}', space=vmem, size = 0x400, scoped, tag = 'output window, operand 1, single buffered']
    #allocation5 [shape = 's32[1]{0}', space=sflag, size = 0x4, scoped, tag = 'scoped memory for tpu_custom_call.1']
    %11 = vsyncpa [#allocation3], 0
    %12 = vsyncpa [#allocation5], 0
    // Predicated region
    $region2: #{tpu_custom_call.1} parent=1 // pred_check
      _
    $region3: #{tpu_custom_call.1} parent=1 // pred_check_branch
      %14 = sbr.rel (0) target = $region5
    $region4: #{tpu_custom_call.1} parent=1 // pred_region
      _
    $region5: #{tpu_custom_call.1} parent=1 // pred_fallthru
      _
    // Predicated region
    $region6: #{tpu_custom_call.1} parent=1 // pred_check
      _
    $region7: #{tpu_custom_call.1} parent=1 // pred_check_branch
      %16 = sbr.rel (0) target = $region9
    $region8: #{tpu_custom_call.1} parent=1 // pred_region
      _
    $region9: #{tpu_custom_call.1} parent=1 // pred_fallthru
      _
    // Predicated region
    $region10: #{tpu_custom_call.1} parent=1 // pred_check
      _
    $region11: #{tpu_custom_call.1} parent=1 // pred_check_branch
      %18 = sbr.rel (0) target = $region13
    $region12: #{tpu_custom_call.1} parent=1 // pred_region
      _
    $region13: #{tpu_custom_call.1} parent=1 // pred_fallthru
      _
    // Predicated region
    $region14: #{tpu_custom_call.1} parent=1 // pred_check
      _
    $region15: #{tpu_custom_call.1} parent=1 // pred_check_branch
      %20 = sbr.rel (0) target = $region17
    $region16: #{tpu_custom_call.1} parent=1 // pred_region
      _
    $region17: #{tpu_custom_call.1} parent=1 // pred_fallthru
      _
    %v21 = vld [vmem:[%s1] sm:$0xff]
    %v22 = vld [vmem:[%s1 + $0x8] sm:$0xff]
    %v23 = vld [vmem:[%s1 + $0x10] sm:$0xff]
    %v24 = vld [vmem:[%s1 + $0x18] sm:$0xff]
    %v25 = vld [vmem:[%s1 + $0x20] sm:$0xff]
    %v26 = vld [vmem:[%s1 + $0x28] sm:$0xff]
    %v27 = vld [vmem:[%s1 + $0x30] sm:$0xff]
    %v28 = vld [vmem:[%s1 + $0x38] sm:$0xff]
    %v29 = vld [vmem:[%s1 + $0x40] sm:$0xff]
    %v30 = vld [vmem:[%s1 + $0x48] sm:$0xff]
    %v31 = vld [vmem:[%s1 + $0x50] sm:$0xff]
    %v32 = vld [vmem:[%s1 + $0x58] sm:$0xff]
    %v33 = vld [vmem:[%s1 + $0x60] sm:$0xff]
    %v34 = vld [vmem:[%s1 + $0x68] sm:$0xff]
    %v35 = vld [vmem:[%s1 + $0x70] sm:$0xff]
    %v36 = vld [vmem:[%s1 + $0x78] sm:$0xff]
    %v37 = vld [vmem:[%s1 + $0x80] sm:$0xff]
    %v38 = vld [vmem:[%s1 + $0x88] sm:$0xff]
    %v39 = vld [vmem:[%s1 + $0x90] sm:$0xff]
    %v40 = vld [vmem:[%s1 + $0x98] sm:$0xff]
    %v41 = vld [vmem:[%s1 + $0xa0] sm:$0xff]
    %v42 = vld [vmem:[%s1 + $0xa8] sm:$0xff]
    %v43 = vld [vmem:[%s1 + $0xb0] sm:$0xff]
    %v44 = vld [vmem:[%s1 + $0xb8] sm:$0xff]
    %v45 = vld [vmem:[%s1 + $0xc0] sm:$0xff]
    %v46 = vld [vmem:[%s1 + $0xc8] sm:$0xff]
    %v47 = vld [vmem:[%s1 + $0xd0] sm:$0xff]
    %v48 = vld [vmem:[%s1 + $0xd8] sm:$0xff]
    %v49 = vld [vmem:[%s1 + $0xe0] sm:$0xff]
    %v50 = vld [vmem:[%s1 + $0xe8] sm:$0xff]
    %v51 = vld [vmem:[%s1 + $0xf0] sm:$0xff]
    %v52 = vld [vmem:[%s1 + $0xf8] sm:$0xff]
    %v53 = vld [vmem:[%s1 + $0x100] sm:$0xff]
    %v54 = vld [vmem:[%s1 + $0x108] sm:$0xff]
    %v55 = vld [vmem:[%s1 + $0x110] sm:$0xff]
    %v56 = vld [vmem:[%s1 + $0x118] sm:$0xff]
    %v57 = vld [vmem:[%s1 + $0x120] sm:$0xff]
    %v58 = vld [vmem:[%s1 + $0x128] sm:$0xff]
    %v59 = vld [vmem:[%s1 + $0x130] sm:$0xff]
    %v60 = vld [vmem:[%s1 + $0x138] sm:$0xff]
    %v61 = vld [vmem:[%s1 + $0x140] sm:$0xff]
    %v62 = vld [vmem:[%s1 + $0x148] sm:$0xff]
    %v63 = vld [vmem:[%s1 + $0x150] sm:$0xff]
    %v64 = vld [vmem:[%s1 + $0x158] sm:$0xff]
    %v65 = vld [vmem:[%s1 + $0x160] sm:$0xff]
    %v66 = vld [vmem:[%s1 + $0x168] sm:$0xff]
    %v67 = vld [vmem:[%s1 + $0x170] sm:$0xff]
    %v68 = vld [vmem:[%s1 + $0x178] sm:$0xff]
    %v69 = vld [vmem:[%s1 + $0x180] sm:$0xff]
    %v70 = vld [vmem:[%s1 + $0x188] sm:$0xff]
    %v71 = vld [vmem:[%s1 + $0x190] sm:$0xff]
    %v72 = vld [vmem:[%s1 + $0x198] sm:$0xff]
    %v73 = vld [vmem:[%s1 + $0x1a0] sm:$0xff]
    %v74 = vld [vmem:[%s1 + $0x1a8] sm:$0xff]
    %v75 = vld [vmem:[%s1 + $0x1b0] sm:$0xff]
    %v76 = vld [vmem:[%s1 + $0x1b8] sm:$0xff]
    %v77 = vld [vmem:[%s1 + $0x1c0] sm:$0xff]
    %v78 = vld [vmem:[%s1 + $0x1c8] sm:$0xff]
    %v79 = vld [vmem:[%s1 + $0x1d0] sm:$0xff]
    %v80 = vld [vmem:[%s1 + $0x1d8] sm:$0xff]
    %v81 = vld [vmem:[%s1 + $0x1e0] sm:$0xff]
    %v82 = vld [vmem:[%s1 + $0x1e8] sm:$0xff]
    %v83 = vld [vmem:[%s1 + $0x1f0] sm:$0xff]
    %v84 = vld [vmem:[%s1 + $0x1f8] sm:$0xff]
    %v85 = vld [vmem:[%s1 + $0x200] sm:$0xff]
    %v86 = vld [vmem:[%s1 + $0x208] sm:$0xff]
    %v87 = vld [vmem:[%s1 + $0x210] sm:$0xff]
    %v88 = vld [vmem:[%s1 + $0x218] sm:$0xff]
    %v89 = vld [vmem:[%s1 + $0x220] sm:$0xff]
    %v90 = vld [vmem:[%s1 + $0x228] sm:$0xff]
    %v91 = vld [vmem:[%s1 + $0x230] sm:$0xff]
    %v92 = vld [vmem:[%s1 + $0x238] sm:$0xff]
    %v93 = vld [vmem:[%s1 + $0x240] sm:$0xff]
    %v94 = vld [vmem:[%s1 + $0x248] sm:$0xff]
    %v95 = vld [vmem:[%s1 + $0x250] sm:$0xff]
    %v96 = vld [vmem:[%s1 + $0x258] sm:$0xff]
    %v97 = vld [vmem:[%s1 + $0x260] sm:$0xff]
    %v98 = vld [vmem:[%s1 + $0x268] sm:$0xff]
    %v99 = vld [vmem:[%s1 + $0x270] sm:$0xff]
    %v100 = vld [vmem:[%s1 + $0x278] sm:$0xff]
    %v101 = vld [vmem:[%s1 + $0x280] sm:$0xff]
    %v102 = vld [vmem:[%s1 + $0x288] sm:$0xff]
    %v103 = vld [vmem:[%s1 + $0x290] sm:$0xff]
    %v104 = vld [vmem:[%s1 + $0x298] sm:$0xff]
    %v105 = vld [vmem:[%s1 + $0x2a0] sm:$0xff]
    %v106 = vld [vmem:[%s1 + $0x2a8] sm:$0xff]
    %v107 = vld [vmem:[%s1 + $0x2b0] sm:$0xff]
    %v108 = vld [vmem:[%s1 + $0x2b8] sm:$0xff]
    %v109 = vld [vmem:[%s1 + $0x2c0] sm:$0xff]
    %v110 = vld [vmem:[%s1 + $0x2c8] sm:$0xff]
    %v111 = vld [vmem:[%s1 + $0x2d0] sm:$0xff]
    %v112 = vld [vmem:[%s1 + $0x2d8] sm:$0xff]
    %v113 = vld [vmem:[%s1 + $0x2e0] sm:$0xff]
    %v114 = vld [vmem:[%s1 + $0x2e8] sm:$0xff]
    %v115 = vld [vmem:[%s1 + $0x2f0] sm:$0xff]
    %v116 = vld [vmem:[%s1 + $0x2f8] sm:$0xff]
    %v117 = vld [vmem:[%s1 + $0x300] sm:$0xff]
    %v118 = vld [vmem:[%s1 + $0x308] sm:$0xff]
    %v119 = vld [vmem:[%s1 + $0x310] sm:$0xff]
    %v120 = vld [vmem:[%s1 + $0x318] sm:$0xff]
    %v121 = vld [vmem:[%s1 + $0x320] sm:$0xff]
    %v122 = vld [vmem:[%s1 + $0x328] sm:$0xff]
    %v123 = vld [vmem:[%s1 + $0x330] sm:$0xff]
    %v124 = vld [vmem:[%s1 + $0x338] sm:$0xff]
    %v125 = vld [vmem:[%s1 + $0x340] sm:$0xff]
    %v126 = vld [vmem:[%s1 + $0x348] sm:$0xff]
    %v127 = vld [vmem:[%s1 + $0x350] sm:$0xff]
    %v128 = vld [vmem:[%s1 + $0x358] sm:$0xff]
    %v129 = vld [vmem:[%s1 + $0x360] sm:$0xff]
    %v130 = vld [vmem:[%s1 + $0x368] sm:$0xff]
    %v131 = vld [vmem:[%s1 + $0x370] sm:$0xff]
    %v132 = vld [vmem:[%s1 + $0x378] sm:$0xff]
    %v133 = vld [vmem:[%s1 + $0x380] sm:$0xff]
    %v134 = vld [vmem:[%s1 + $0x388] sm:$0xff]
    %v135 = vld [vmem:[%s1 + $0x390] sm:$0xff]
    %v136 = vld [vmem:[%s1 + $0x398] sm:$0xff]
    %v137 = vld [vmem:[%s1 + $0x3a0] sm:$0xff]
    %v138 = vld [vmem:[%s1 + $0x3a8] sm:$0xff]
    %v139 = vld [vmem:[%s1 + $0x3b0] sm:$0xff]
    %v140 = vld [vmem:[%s1 + $0x3b8] sm:$0xff]
    %v141 = vld [vmem:[%s1 + $0x3c0] sm:$0xff]
    %v142 = vld [vmem:[%s1 + $0x3c8] sm:$0xff]
    %v143 = vld [vmem:[%s1 + $0x3d0] sm:$0xff]
    %v144 = vld [vmem:[%s1 + $0x3d8] sm:$0xff]
    %v145 = vld [vmem:[%s1 + $0x3e0] sm:$0xff]
    %v146 = vld [vmem:[%s1 + $0x3e8] sm:$0xff]
    %v147 = vld [vmem:[%s1 + $0x3f0] sm:$0xff]
    %v148 = vld [vmem:[%s1 + $0x3f8] sm:$0xff]
    %v149 = vld [vmem:[%s2] sm:$0xff]
    %v150 = vld [vmem:[%s2 + $0x8] sm:$0xff]
    %v151 = vld [vmem:[%s2 + $0x10] sm:$0xff]
    %v152 = vld [vmem:[%s2 + $0x18] sm:$0xff]
    %v153 = vld [vmem:[%s3] sm:$0xff]
    %v154 = vld [vmem:[%s3 + $0x8] sm:$0xff]
    %v155 = vld [vmem:[%s3 + $0x10] sm:$0xff]
    %v156 = vld [vmem:[%s3 + $0x18] sm:$0xff]
    %v157 = vld [vmem:[%s0] sm:$0xff]
    %v158 = vld [vmem:[%s0 + $0x8] sm:$0xff]
    %v159 = vld [vmem:[%s0 + $0x10] sm:$0xff]
    %v160 = vld [vmem:[%s0 + $0x18] sm:$0xff]
    %v161 = vld [vmem:[%s0 + $0x20] sm:$0xff]
    %v162 = vld [vmem:[%s0 + $0x28] sm:$0xff]
    %v163 = vld [vmem:[%s0 + $0x30] sm:$0xff]
    %v164 = vld [vmem:[%s0 + $0x38] sm:$0xff]
    %v165 = vunpack.c.l.bf16 %v157
    %v166 = vunpack.c.h.bf16 %v157
    %v167 = vunpack.c.l.bf16 %v158
    %v168 = vunpack.c.h.bf16 %v158
    %v169 = vunpack.c.l.bf16 %v159
    %v170 = vunpack.c.h.bf16 %v159
    %v171 = vunpack.c.l.bf16 %v160
    %v172 = vunpack.c.h.bf16 %v160
    %v173 = vunpack.c.l.bf16 %v161
    %v174 = vunpack.c.h.bf16 %v161
    %v175 = vunpack.c.l.bf16 %v162
    %v176 = vunpack.c.h.bf16 %v162
    %v177 = vunpack.c.l.bf16 %v163
    %v178 = vunpack.c.h.bf16 %v163
    %v179 = vunpack.c.l.bf16 %v164
    %v180 = vunpack.c.h.bf16 %v164
    %181 = vmatprep.subr.mxu0 0.0
    %182 = vmatpush1.msra.mxu0 %v21
    %183 = vmatprep.subr.mxu0 0.0
    %184 = vmatpush1.msra.mxu0 %v22
    %185 = vmatprep.subr.mxu0 0.0
    %186 = vmatpush1.msra.mxu0 %v23
    %187 = vmatprep.subr.mxu0 0.0
    %188 = vmatpush1.msra.mxu0 %v24
    %189 = vmatprep.subr.mxu0 0.0
    %190 = vmatpush1.msra.mxu0 %v25
    %191 = vmatprep.subr.mxu0 0.0
    %192 = vmatpush1.msra.mxu0 %v26
    %193 = vmatprep.subr.mxu0 0.0
    %194 = vmatpush1.msra.mxu0 %v27
    %195 = vmatprep.subr.mxu0 0.0
    %196 = vmatpush1.msra.mxu0 %v28
    %197 = vmatprep.subr.mxu0 0.0
    %198 = vmatpush1.msra.mxu0 %v29
    %199 = vmatprep.subr.mxu0 0.0
    %200 = vmatpush1.msra.mxu0 %v30
    %201 = vmatprep.subr.mxu0 0.0
    %202 = vmatpush1.msra.mxu0 %v31
    %203 = vmatprep.subr.mxu0 0.0
    %204 = vmatpush1.msra.mxu0 %v32
    %205 = vmatprep.subr.mxu0 0.0
    %206 = vmatpush1.msra.mxu0 %v33
    %207 = vmatprep.subr.mxu0 0.0
    %208 = vmatpush1.msra.mxu0 %v34
    %209 = vmatprep.subr.mxu0 0.0
    %210 = vmatpush1.msra.mxu0 %v35
    %211 = vmatprep.subr.mxu0 0.0
    %212 = vmatpush1.msra.mxu0 %v36
    %213 = vmatprep.subr.mxu0 0.0
    %214 = vmatpush1.msra.mxu0 %v37
    %215 = vmatprep.subr.mxu0 0.0
    %216 = vmatpush1.msra.mxu0 %v38
    %217 = vmatprep.subr.mxu0 0.0
    %218 = vmatpush1.msra.mxu0 %v39
    %219 = vmatprep.subr.mxu0 0.0
    %220 = vmatpush1.msra.mxu0 %v40
    %221 = vmatprep.subr.mxu0 0.0
    %222 = vmatpush1.msra.mxu0 %v41
    %223 = vmatprep.subr.mxu0 0.0
    %224 = vmatpush1.msra.mxu0 %v42
    %225 = vmatprep.subr.mxu0 0.0
    %226 = vmatpush1.msra.mxu0 %v43
    %227 = vmatprep.subr.mxu0 0.0
    %228 = vmatpush1.msra.mxu0 %v44
    %229 = vmatprep.subr.mxu0 0.0
    %230 = vmatpush1.msra.mxu0 %v45
    %231 = vmatprep.subr.mxu0 0.0
    %232 = vmatpush1.msra.mxu0 %v46
    %233 = vmatprep.subr.mxu0 0.0
    %234 = vmatpush1.msra.mxu0 %v47
    %235 = vmatprep.subr.mxu0 0.0
    %236 = vmatpush1.msra.mxu0 %v48
    %237 = vmatprep.subr.mxu0 0.0
    %238 = vmatpush1.msra.mxu0 %v49
    %239 = vmatprep.subr.mxu0 0.0
    %240 = vmatpush1.msra.mxu0 %v50
    %241 = vmatprep.subr.mxu0 0.0
    %242 = vmatpush1.msra.mxu0 %v51
    %243 = vmatprep.subr.mxu0 0.0
    %244 = vmatpush1.msra.mxu0 %v52
    %245 = vmatprep.mubr.f32.mxu0 %v166
    %246 = vmatmul.mubr.f32.gmra.mrb[0].mxu0 %v165
    %v247 = vpop.f32.mrb[0].mxu0
    %v248 = vadd.f32 0.0, %v247
    %v249 = vpop.f32.mrb[0].mxu0
    %250 = vmatprep.mubr.f32.mxu0 %v174
    %251 = vmatmul.mubr.f32.gmra.mrb[0].mxu0 %v173
    %v252 = vpop.f32.mrb[0].mxu0
    %v253 = vadd.f32 0.0, %v252
    %v254 = vpop.f32.mrb[0].mxu0
    %255 = vdwg.mxu0
    %256 = vmatprep.subr.mxu0 0.0
    %257 = vmatpush1.msra.mxu0 %v53
    %258 = vmatprep.subr.mxu0 0.0
    %259 = vmatpush1.msra.mxu0 %v54
    %260 = vmatprep.subr.mxu0 0.0
    %261 = vmatpush1.msra.mxu0 %v55
    %262 = vmatprep.subr.mxu0 0.0
    %263 = vmatpush1.msra.mxu0 %v56
    %264 = vmatprep.subr.mxu0 0.0
    %265 = vmatpush1.msra.mxu0 %v57
    %266 = vmatprep.subr.mxu0 0.0
    %267 = vmatpush1.msra.mxu0 %v58
    %268 = vmatprep.subr.mxu0 0.0
    %269 = vmatpush1.msra.mxu0 %v59
    %270 = vmatprep.subr.mxu0 0.0
    %271 = vmatpush1.msra.mxu0 %v60
    %272 = vmatprep.subr.mxu0 0.0
    %273 = vmatpush1.msra.mxu0 %v61
    %274 = vmatprep.subr.mxu0 0.0
    %275 = vmatpush1.msra.mxu0 %v62
    %276 = vmatprep.subr.mxu0 0.0
    %277 = vmatpush1.msra.mxu0 %v63
    %278 = vmatprep.subr.mxu0 0.0
    %279 = vmatpush1.msra.mxu0 %v64
    %280 = vmatprep.subr.mxu0 0.0
    %281 = vmatpush1.msra.mxu0 %v65
    %282 = vmatprep.subr.mxu0 0.0
    %283 = vmatpush1.msra.mxu0 %v66
    %284 = vmatprep.subr.mxu0 0.0
    %285 = vmatpush1.msra.mxu0 %v67
    %286 = vmatprep.subr.mxu0 0.0
    %287 = vmatpush1.msra.mxu0 %v68
    %288 = vmatprep.subr.mxu0 0.0
    %289 = vmatpush1.msra.mxu0 %v69
    %290 = vmatprep.subr.mxu0 0.0
    %291 = vmatpush1.msra.mxu0 %v70
    %292 = vmatprep.subr.mxu0 0.0
    %293 = vmatpush1.msra.mxu0 %v71
    %294 = vmatprep.subr.mxu0 0.0
    %295 = vmatpush1.msra.mxu0 %v72
    %296 = vmatprep.subr.mxu0 0.0
    %297 = vmatpush1.msra.mxu0 %v73
    %298 = vmatprep.subr.mxu0 0.0
    %299 = vmatpush1.msra.mxu0 %v74
    %300 = vmatprep.subr.mxu0 0.0
    %301 = vmatpush1.msra.mxu0 %v75
    %302 = vmatprep.subr.mxu0 0.0
    %303 = vmatpush1.msra.mxu0 %v76
    %304 = vmatprep.subr.mxu0 0.0
    %305 = vmatpush1.msra.mxu0 %v77
    %306 = vmatprep.subr.mxu0 0.0
    %307 = vmatpush1.msra.mxu0 %v78
    %308 = vmatprep.subr.mxu0 0.0
    %309 = vmatpush1.msra.mxu0 %v79
    %310 = vmatprep.subr.mxu0 0.0
    %311 = vmatpush1.msra.mxu0 %v80
    %312 = vmatprep.subr.mxu0 0.0
    %313 = vmatpush1.msra.mxu0 %v81
    %314 = vmatprep.subr.mxu0 0.0
    %315 = vmatpush1.msra.mxu0 %v82
    %316 = vmatprep.subr.mxu0 0.0
    %317 = vmatpush1.msra.mxu0 %v83
    %318 = vmatprep.subr.mxu0 0.0
    %319 = vmatpush1.msra.mxu0 %v84
    %320 = vmatprep.mubr.f32.mxu0 %v168
    %321 = vmatmul.mubr.f32.gmra.mrb[0].mxu0 %v167
    %v322 = vpop.f32.mrb[0].mxu0
    %v323 = vadd.f32 %v248, %v322
    %v324 = vpop.f32.mrb[0].mxu0
    %325 = vmatprep.mubr.f32.mxu0 %v176
    %326 = vmatmul.mubr.f32.gmra.mrb[0].mxu0 %v175
    %v327 = vpop.f32.mrb[0].mxu0
    %v328 = vadd.f32 %v253, %v327
    %v329 = vpop.f32.mrb[0].mxu0
    %330 = vdwg.mxu0
    %331 = vmatprep.subr.mxu0 0.0
    %332 = vmatpush1.msra.mxu0 %v85
    %333 = vmatprep.subr.mxu0 0.0
    %334 = vmatpush1.msra.mxu0 %v86
    %335 = vmatprep.subr.mxu0 0.0
    %336 = vmatpush1.msra.mxu0 %v87
    %337 = vmatprep.subr.mxu0 0.0
    %338 = vmatpush1.msra.mxu0 %v88
    %339 = vmatprep.subr.mxu0 0.0
    %340 = vmatpush1.msra.mxu0 %v89
    %341 = vmatprep.subr.mxu0 0.0
    %342 = vmatpush1.msra.mxu0 %v90
    %343 = vmatprep.subr.mxu0 0.0
    %344 = vmatpush1.msra.mxu0 %v91
    %345 = vmatprep.subr.mxu0 0.0
    %346 = vmatpush1.msra.mxu0 %v92
    %347 = vmatprep.subr.mxu0 0.0
    %348 = vmatpush1.msra.mxu0 %v93
    %349 = vmatprep.subr.mxu0 0.0
    %350 = vmatpush1.msra.mxu0 %v94
    %351 = vmatprep.subr.mxu0 0.0
    %352 = vmatpush1.msra.mxu0 %v95
    %353 = vmatprep.subr.mxu0 0.0
    %354 = vmatpush1.msra.mxu0 %v96
    %355 = vmatprep.subr.mxu0 0.0
    %356 = vmatpush1.msra.mxu0 %v97
    %357 = vmatprep.subr.mxu0 0.0
    %358 = vmatpush1.msra.mxu0 %v98
    %359 = vmatprep.subr.mxu0 0.0
    %360 = vmatpush1.msra.mxu0 %v99
    %361 = vmatprep.subr.mxu0 0.0
    %362 = vmatpush1.msra.mxu0 %v100
    %363 = vmatprep.subr.mxu0 0.0
    %364 = vmatpush1.msra.mxu0 %v101
    %365 = vmatprep.subr.mxu0 0.0
    %366 = vmatpush1.msra.mxu0 %v102
    %367 = vmatprep.subr.mxu0 0.0
    %368 = vmatpush1.msra.mxu0 %v103
    %369 = vmatprep.subr.mxu0 0.0
    %370 = vmatpush1.msra.mxu0 %v104
    %371 = vmatprep.subr.mxu0 0.0
    %372 = vmatpush1.msra.mxu0 %v105
    %373 = vmatprep.subr.mxu0 0.0
    %374 = vmatpush1.msra.mxu0 %v106
    %375 = vmatprep.subr.mxu0 0.0
    %376 = vmatpush1.msra.mxu0 %v107
    %377 = vmatprep.subr.mxu0 0.0
    %378 = vmatpush1.msra.mxu0 %v108
    %379 = vmatprep.subr.mxu0 0.0
    %380 = vmatpush1.msra.mxu0 %v109
    %381 = vmatprep.subr.mxu0 0.0
    %382 = vmatpush1.msra.mxu0 %v110
    %383 = vmatprep.subr.mxu0 0.0
    %384 = vmatpush1.msra.mxu0 %v111
    %385 = vmatprep.subr.mxu0 0.0
    %386 = vmatpush1.msra.mxu0 %v112
    %387 = vmatprep.subr.mxu0 0.0
    %388 = vmatpush1.msra.mxu0 %v113
    %389 = vmatprep.subr.mxu0 0.0
    %390 = vmatpush1.msra.mxu0 %v114
    %391 = vmatprep.subr.mxu0 0.0
    %392 = vmatpush1.msra.mxu0 %v115
    %393 = vmatprep.subr.mxu0 0.0
    %394 = vmatpush1.msra.mxu0 %v116
    %395 = vmatprep.mubr.f32.mxu0 %v170
    %396 = vmatmul.mubr.f32.gmra.mrb[0].mxu0 %v169
    %v397 = vpop.f32.mrb[0].mxu0
    %v398 = vadd.f32 %v323, %v397
    %v399 = vpop.f32.mrb[0].mxu0
    %400 = vmatprep.mubr.f32.mxu0 %v178
    %401 = vmatmul.mubr.f32.gmra.mrb[0].mxu0 %v177
    %v402 = vpop.f32.mrb[0].mxu0
    %v403 = vadd.f32 %v328, %v402
    %v404 = vpop.f32.mrb[0].mxu0
    %405 = vdwg.mxu0
    %406 = vmatprep.subr.mxu0 0.0
    %407 = vmatpush1.msra.mxu0 %v117
    %408 = vmatprep.subr.mxu0 0.0
    %409 = vmatpush1.msra.mxu0 %v118
    %410 = vmatprep.subr.mxu0 0.0
    %411 = vmatpush1.msra.mxu0 %v119
    %412 = vmatprep.subr.mxu0 0.0
    %413 = vmatpush1.msra.mxu0 %v120
    %414 = vmatprep.subr.mxu0 0.0
    %415 = vmatpush1.msra.mxu0 %v121
    %416 = vmatprep.subr.mxu0 0.0
    %417 = vmatpush1.msra.mxu0 %v122
    %418 = vmatprep.subr.mxu0 0.0
    %419 = vmatpush1.msra.mxu0 %v123
    %420 = vmatprep.subr.mxu0 0.0
    %421 = vmatpush1.msra.mxu0 %v124
    %422 = vmatprep.subr.mxu0 0.0
    %423 = vmatpush1.msra.mxu0 %v125
    %424 = vmatprep.subr.mxu0 0.0
    %425 = vmatpush1.msra.mxu0 %v126
    %426 = vmatprep.subr.mxu0 0.0
    %427 = vmatpush1.msra.mxu0 %v127
    %428 = vmatprep.subr.mxu0 0.0
    %429 = vmatpush1.msra.mxu0 %v128
    %430 = vmatprep.subr.mxu0 0.0
    %431 = vmatpush1.msra.mxu0 %v129
    %432 = vmatprep.subr.mxu0 0.0
    %433 = vmatpush1.msra.mxu0 %v130
    %434 = vmatprep.subr.mxu0 0.0
    %435 = vmatpush1.msra.mxu0 %v131
    %436 = vmatprep.subr.mxu0 0.0
    %437 = vmatpush1.msra.mxu0 %v132
    %438 = vmatprep.subr.mxu0 0.0
    %439 = vmatpush1.msra.mxu0 %v133
    %440 = vmatprep.subr.mxu0 0.0
    %441 = vmatpush1.msra.mxu0 %v134
    %442 = vmatprep.subr.mxu0 0.0
    %443 = vmatpush1.msra.mxu0 %v135
    %444 = vmatprep.subr.mxu0 0.0
    %445 = vmatpush1.msra.mxu0 %v136
    %446 = vmatprep.subr.mxu0 0.0
    %447 = vmatpush1.msra.mxu0 %v137
    %448 = vmatprep.subr.mxu0 0.0
    %449 = vmatpush1.msra.mxu0 %v138
    %450 = vmatprep.subr.mxu0 0.0
    %451 = vmatpush1.msra.mxu0 %v139
    %452 = vmatprep.subr.mxu0 0.0
    %453 = vmatpush1.msra.mxu0 %v140
    %454 = vmatprep.subr.mxu0 0.0
    %455 = vmatpush1.msra.mxu0 %v141
    %456 = vmatprep.subr.mxu0 0.0
    %457 = vmatpush1.msra.mxu0 %v142
    %458 = vmatprep.subr.mxu0 0.0
    %459 = vmatpush1.msra.mxu0 %v143
    %460 = vmatprep.subr.mxu0 0.0
    %461 = vmatpush1.msra.mxu0 %v144
    %462 = vmatprep.subr.mxu0 0.0
    %463 = vmatpush1.msra.mxu0 %v145
    %464 = vmatprep.subr.mxu0 0.0
    %465 = vmatpush1.msra.mxu0 %v146
    %466 = vmatprep.subr.mxu0 0.0
    %467 = vmatpush1.msra.mxu0 %v147
    %468 = vmatprep.subr.mxu0 0.0
    %469 = vmatpush1.msra.mxu0 %v148
    %470 = vmatprep.mubr.f32.mxu0 %v172
    %471 = vmatmul.mubr.f32.gmra.mrb[0].mxu0 %v171
    %v472 = vpop.f32.mrb[0].mxu0
    %v473 = vadd.f32 %v398, %v472
    %v474 = vpop.f32.mrb[0].mxu0
    %475 = vmatprep.mubr.f32.mxu0 %v180
    %476 = vmatmul.mubr.f32.gmra.mrb[0].mxu0 %v179
    %v477 = vpop.f32.mrb[0].mxu0
    %v478 = vadd.f32 %v403, %v477
    %v479 = vpop.f32.mrb[0].mxu0
    %480 = vdwg.mxu0
    %vm481 = vcmp.gt.f32.partialorder 0.0, 1.0
    %v482 = vsel %vm481, 1, 0
    %v483 = vcvt.s32.f32 %v482
    %v484 = vsub.f32 %v473, %v483
    %vm485 = vcmp.gt.f32.partialorder %v484, 1.0
    %v486 = vsel %vm485, 1, 0
    %v487 = vcvt.s32.f32 %v486
    %vm488 = vcmask 261120
    %v490 = vsel %vm488, %v487, 0
    %492 = vmatprep.subr.mxu0 0.0
    %493 = vmatpush1.msra.mxu0 %v149
    %494 = vmatprep.subr.mxu0 0.0
    %495 = vmatpush1.msra.mxu0 %v150
    %496 = vmatprep.subr.mxu0 0.0
    %497 = vmatpush1.msra.mxu0 %v151
    %498 = vmatprep.subr.mxu0 0.0
    %499 = vmatpush1.msra.mxu0 %v152
    %500 = vmatprep.subr.mxu0 0.0
    %501 = vmatpush1.msra.mxu0 0.0
    %502 = vmatprep.subr.mxu0 0.0
    %503 = vmatpush1.msra.mxu0 0.0
    %504 = vmatprep.subr.mxu0 0.0
    %505 = vmatpush1.msra.mxu0 0.0
    %506 = vmatprep.subr.mxu0 0.0
    %507 = vmatpush1.msra.mxu0 0.0
    %508 = vmatprep.subr.mxu0 0.0
    %509 = vmatpush1.msra.mxu0 0.0
    %510 = vmatprep.subr.mxu0 0.0
    %511 = vmatpush1.msra.mxu0 0.0
    %512 = vmatprep.subr.mxu0 0.0
    %513 = vmatpush1.msra.mxu0 0.0
    %514 = vmatprep.subr.mxu0 0.0
    %515 = vmatpush1.msra.mxu0 0.0
    %516 = vmatprep.subr.mxu0 0.0
    %517 = vmatpush1.msra.mxu0 0.0
    %518 = vmatprep.subr.mxu0 0.0
    %519 = vmatpush1.msra.mxu0 0.0
    %520 = vmatprep.subr.mxu0 0.0
    %521 = vmatpush1.msra.mxu0 0.0
    %522 = vmatprep.subr.mxu0 0.0
    %523 = vmatpush1.msra.mxu0 0.0
    %524 = vmatprep.subr.mxu0 0.0
    %525 = vmatpush1.msra.mxu0 0.0
    %526 = vmatprep.subr.mxu0 0.0
    %527 = vmatpush1.msra.mxu0 0.0
    %528 = vmatprep.subr.mxu0 0.0
    %529 = vmatpush1.msra.mxu0 0.0
    %530 = vmatprep.subr.mxu0 0.0
    %531 = vmatpush1.msra.mxu0 0.0
    %532 = vmatprep.subr.mxu0 0.0
    %533 = vmatpush1.msra.mxu0 0.0
    %534 = vmatprep.subr.mxu0 0.0
    %535 = vmatpush1.msra.mxu0 0.0
    %536 = vmatprep.subr.mxu0 0.0
    %537 = vmatpush1.msra.mxu0 0.0
    %538 = vmatprep.subr.mxu0 0.0
    %539 = vmatpush1.msra.mxu0 0.0
    %540 = vmatprep.subr.mxu0 0.0
    %541 = vmatpush1.msra.mxu0 0.0
    %542 = vmatprep.subr.mxu0 0.0
    %543 = vmatpush1.msra.mxu0 0.0
    %544 = vmatprep.subr.mxu0 0.0
    %545 = vmatpush1.msra.mxu0 0.0
    %546 = vmatprep.subr.mxu0 0.0
    %547 = vmatpush1.msra.mxu0 0.0
    %548 = vmatprep.subr.mxu0 0.0
    %549 = vmatpush1.msra.mxu0 0.0
    %550 = vmatprep.subr.mxu0 0.0
    %551 = vmatpush1.msra.mxu0 0.0
    %552 = vmatprep.subr.mxu0 0.0
    %553 = vmatpush1.msra.mxu0 0.0
    %554 = vmatprep.subr.mxu0 0.0
    %555 = vmatpush1.msra.mxu0 0.0
    %556 = vmatprep.mubr.f32.mxu0 0.0
    %557 = vmatmul.mubr.f32.gmra.mrb[0].mxu0 %v490
    %v558 = vpop.f32.mrb[0].mxu0
    %v559 = vadd.f32 0.0, %v558
    %v560 = vpop.f32.mrb[0].mxu0
    %561 = vdwg.mxu0
    %v562 = vsub.f32 %v559, %v483
    %vm563 = vcmp.gt.f32.partialorder %v562, 1.0
    %v564 = vsel %vm563, 1, 0
    %v565 = vcvt.s32.f32 %v564
    %v567 = vsel %vm488, %v565, 0
    %569 = vmatprep.subr.mxu0 0.0
    %570 = vmatpush1.msra.mxu0 %v153
    %571 = vmatprep.subr.mxu0 0.0
    %572 = vmatpush1.msra.mxu0 %v154
    %573 = vmatprep.subr.mxu0 0.0
    %574 = vmatpush1.msra.mxu0 %v155
    %575 = vmatprep.subr.mxu0 0.0
    %576 = vmatpush1.msra.mxu0 %v156
    %577 = vmatprep.subr.mxu0 0.0
    %578 = vmatpush1.msra.mxu0 0.0
    %579 = vmatprep.subr.mxu0 0.0
    %580 = vmatpush1.msra.mxu0 0.0
    %581 = vmatprep.subr.mxu0 0.0
    %582 = vmatpush1.msra.mxu0 0.0
    %583 = vmatprep.subr.mxu0 0.0
    %584 = vmatpush1.msra.mxu0 0.0
    %585 = vmatprep.subr.mxu0 0.0
    %586 = vmatpush1.msra.mxu0 0.0
    %587 = vmatprep.subr.mxu0 0.0
    %588 = vmatpush1.msra.mxu0 0.0
    %589 = vmatprep.subr.mxu0 0.0
    %590 = vmatpush1.msra.mxu0 0.0
    %591 = vmatprep.subr.mxu0 0.0
    %592 = vmatpush1.msra.mxu0 0.0
    %593 = vmatprep.subr.mxu0 0.0
    %594 = vmatpush1.msra.mxu0 0.0
    %595 = vmatprep.subr.mxu0 0.0
    %596 = vmatpush1.msra.mxu0 0.0
    %597 = vmatprep.subr.mxu0 0.0
    %598 = vmatpush1.msra.mxu0 0.0
    %599 = vmatprep.subr.mxu0 0.0
    %600 = vmatpush1.msra.mxu0 0.0
    %601 = vmatprep.subr.mxu0 0.0
    %602 = vmatpush1.msra.mxu0 0.0
    %603 = vmatprep.subr.mxu0 0.0
    %604 = vmatpush1.msra.mxu0 0.0
    %605 = vmatprep.subr.mxu0 0.0
    %606 = vmatpush1.msra.mxu0 0.0
    %607 = vmatprep.subr.mxu0 0.0
    %608 = vmatpush1.msra.mxu0 0.0
    %609 = vmatprep.subr.mxu0 0.0
    %610 = vmatpush1.msra.mxu0 0.0
    %611 = vmatprep.subr.mxu0 0.0
    %612 = vmatpush1.msra.mxu0 0.0
    %613 = vmatprep.subr.mxu0 0.0
    %614 = vmatpush1.msra.mxu0 0.0
    %615 = vmatprep.subr.mxu0 0.0
    %616 = vmatpush1.msra.mxu0 0.0
    %617 = vmatprep.subr.mxu0 0.0
    %618 = vmatpush1.msra.mxu0 0.0
    %619 = vmatprep.subr.mxu0 0.0
    %620 = vmatpush1.msra.mxu0 0.0
    %621 = vmatprep.subr.mxu0 0.0
    %622 = vmatpush1.msra.mxu0 0.0
    %623 = vmatprep.subr.mxu0 0.0
    %624 = vmatpush1.msra.mxu0 0.0
    %625 = vmatprep.subr.mxu0 0.0
    %626 = vmatpush1.msra.mxu0 0.0
    %627 = vmatprep.subr.mxu0 0.0
    %628 = vmatpush1.msra.mxu0 0.0
    %629 = vmatprep.subr.mxu0 0.0
    %630 = vmatpush1.msra.mxu0 0.0
    %631 = vmatprep.subr.mxu0 0.0
    %632 = vmatpush1.msra.mxu0 0.0
    %633 = vmatprep.mubr.f32.mxu0 0.0
    %634 = vmatmul.mubr.f32.gmra.mrb[0].mxu0 %v567
    %v635 = vpop.f32.mrb[0].mxu0
    %v636 = vadd.f32 0.0, %v635
    %v637 = vpop.f32.mrb[0].mxu0
    %638 = vdwg.mxu0
    %v639 = vsub.f32 %v636, %v483
    %vm640 = vcmp.gt.f32.partialorder %v639, 1.0
    %v641 = vsel %vm640, 1, 0
    %v642 = vcvt.s32.f32 %v641
    %v643 = vrot.slane %v487, 6
    %v645 = vsub.f32 %v473, %v643
    %vm646 = vcmp.gt.f32.partialorder %v645, 1.0
    %v647 = vsel %vm646, 1, 0
    %v648 = vcvt.s32.f32 %v647
    %v650 = vrot.slane %v648, 2
    %v651 = vsel %vm488, %v650, 0
    %653 = vmatprep.subr.mxu0 0.0
    %654 = vmatpush1.msra.mxu0 %v149
    %655 = vmatprep.subr.mxu0 0.0
    %656 = vmatpush1.msra.mxu0 %v150
    %657 = vmatprep.subr.mxu0 0.0
    %658 = vmatpush1.msra.mxu0 %v151
    %659 = vmatprep.subr.mxu0 0.0
    %660 = vmatpush1.msra.mxu0 %v152
    %661 = vmatprep.subr.mxu0 0.0
    %662 = vmatpush1.msra.mxu0 0.0
    %663 = vmatprep.subr.mxu0 0.0
    %664 = vmatpush1.msra.mxu0 0.0
    %665 = vmatprep.subr.mxu0 0.0
    %666 = vmatpush1.msra.mxu0 0.0
    %667 = vmatprep.subr.mxu0 0.0
    %668 = vmatpush1.msra.mxu0 0.0
    %669 = vmatprep.subr.mxu0 0.0
    %670 = vmatpush1.msra.mxu0 0.0
    %671 = vmatprep.subr.mxu0 0.0
    %672 = vmatpush1.msra.mxu0 0.0
    %673 = vmatprep.subr.mxu0 0.0
    %674 = vmatpush1.msra.mxu0 0.0
    %675 = vmatprep.subr.mxu0 0.0
    %676 = vmatpush1.msra.mxu0 0.0
    %677 = vmatprep.subr.mxu0 0.0
    %678 = vmatpush1.msra.mxu0 0.0
    %679 = vmatprep.subr.mxu0 0.0
    %680 = vmatpush1.msra.mxu0 0.0
    %681 = vmatprep.subr.mxu0 0.0
    %682 = vmatpush1.msra.mxu0 0.0
    %683 = vmatprep.subr.mxu0 0.0
    %684 = vmatpush1.msra.mxu0 0.0
    %685 = vmatprep.subr.mxu0 0.0
    %686 = vmatpush1.msra.mxu0 0.0
    %687 = vmatprep.subr.mxu0 0.0
    %688 = vmatpush1.msra.mxu0 0.0
    %689 = vmatprep.subr.mxu0 0.0
    %690 = vmatpush1.msra.mxu0 0.0
    %691 = vmatprep.subr.mxu0 0.0
    %692 = vmatpush1.msra.mxu0 0.0
    %693 = vmatprep.subr.mxu0 0.0
    %694 = vmatpush1.msra.mxu0 0.0
    %695 = vmatprep.subr.mxu0 0.0
    %696 = vmatpush1.msra.mxu0 0.0
    %697 = vmatprep.subr.mxu0 0.0
    %698 = vmatpush1.msra.mxu0 0.0
    %699 = vmatprep.subr.mxu0 0.0
    %700 = vmatpush1.msra.mxu0 0.0
    %701 = vmatprep.subr.mxu0 0.0
    %702 = vmatpush1.msra.mxu0 0.0
    %703 = vmatprep.subr.mxu0 0.0
    %704 = vmatpush1.msra.mxu0 0.0
    %705 = vmatprep.subr.mxu0 0.0
    %706 = vmatpush1.msra.mxu0 0.0
    %707 = vmatprep.subr.mxu0 0.0
    %708 = vmatpush1.msra.mxu0 0.0
    %709 = vmatprep.subr.mxu0 0.0
    %710 = vmatpush1.msra.mxu0 0.0
    %711 = vmatprep.subr.mxu0 0.0
    %712 = vmatpush1.msra.mxu0 0.0
    %713 = vmatprep.subr.mxu0 0.0
    %714 = vmatpush1.msra.mxu0 0.0
    %715 = vmatprep.subr.mxu0 0.0
    %716 = vmatpush1.msra.mxu0 0.0
    %717 = vmatprep.mubr.f32.mxu0 0.0
    %718 = vmatmul.mubr.f32.gmra.mrb[0].mxu0 %v651
    %v719 = vpop.f32.mrb[0].mxu0
    %v720 = vadd.f32 0.0, %v719
    %v721 = vpop.f32.mrb[0].mxu0
    %722 = vdwg.mxu0
    %v723 = vsub.f32 %v720, %v565
    %vm724 = vcmp.gt.f32.partialorder %v723, 1.0
    %v725 = vsel %vm724, 1, 0
    %v726 = vcvt.s32.f32 %v725
    %v728 = vsel %vm488, %v726, 0
    %730 = vmatprep.subr.mxu0 0.0
    %731 = vmatpush1.msra.mxu0 %v153
    %732 = vmatprep.subr.mxu0 0.0
    %733 = vmatpush1.msra.mxu0 %v154
    %734 = vmatprep.subr.mxu0 0.0
    %735 = vmatpush1.msra.mxu0 %v155
    %736 = vmatprep.subr.mxu0 0.0
    %737 = vmatpush1.msra.mxu0 %v156
    %738 = vmatprep.subr.mxu0 0.0
    %739 = vmatpush1.msra.mxu0 0.0
    %740 = vmatprep.subr.mxu0 0.0
    %741 = vmatpush1.msra.mxu0 0.0
    %742 = vmatprep.subr.mxu0 0.0
    %743 = vmatpush1.msra.mxu0 0.0
    %744 = vmatprep.subr.mxu0 0.0
    %745 = vmatpush1.msra.mxu0 0.0
    %746 = vmatprep.subr.mxu0 0.0
    %747 = vmatpush1.msra.mxu0 0.0
    %748 = vmatprep.subr.mxu0 0.0
    %749 = vmatpush1.msra.mxu0 0.0
    %750 = vmatprep.subr.mxu0 0.0
    %751 = vmatpush1.msra.mxu0 0.0
    %752 = vmatprep.subr.mxu0 0.0
    %753 = vmatpush1.msra.mxu0 0.0
    %754 = vmatprep.subr.mxu0 0.0
    %755 = vmatpush1.msra.mxu0 0.0
    %756 = vmatprep.subr.mxu0 0.0
    %757 = vmatpush1.msra.mxu0 0.0
    %758 = vmatprep.subr.mxu0 0.0
    %759 = vmatpush1.msra.mxu0 0.0
    %760 = vmatprep.subr.mxu0 0.0
    %761 = vmatpush1.msra.mxu0 0.0
    %762 = vmatprep.subr.mxu0 0.0
    %763 = vmatpush1.msra.mxu0 0.0
    %764 = vmatprep.subr.mxu0 0.0
    %765 = vmatpush1.msra.mxu0 0.0
    %766 = vmatprep.subr.mxu0 0.0
    %767 = vmatpush1.msra.mxu0 0.0
    %768 = vmatprep.subr.mxu0 0.0
    %769 = vmatpush1.msra.mxu0 0.0
    %770 = vmatprep.subr.mxu0 0.0
    %771 = vmatpush1.msra.mxu0 0.0
    %772 = vmatprep.subr.mxu0 0.0
    %773 = vmatpush1.msra.mxu0 0.0
    %774 = vmatprep.subr.mxu0 0.0
    %775 = vmatpush1.msra.mxu0 0.0
    %776 = vmatprep.subr.mxu0 0.0
    %777 = vmatpush1.msra.mxu0 0.0
    %778 = vmatprep.subr.mxu0 0.0
    %779 = vmatpush1.msra.mxu0 0.0
    %780 = vmatprep.subr.mxu0 0.0
    %781 = vmatpush1.msra.mxu0 0.0
    %782 = vmatprep.subr.mxu0 0.0
    %783 = vmatpush1.msra.mxu0 0.0
    %784 = vmatprep.subr.mxu0 0.0
    %785 = vmatpush1.msra.mxu0 0.0
    %786 = vmatprep.subr.mxu0 0.0
    %787 = vmatpush1.msra.mxu0 0.0
    %788 = vmatprep.subr.mxu0 0.0
    %789 = vmatpush1.msra.mxu0 0.0
    %790 = vmatprep.subr.mxu0 0.0
    %791 = vmatpush1.msra.mxu0 0.0
    %792 = vmatprep.subr.mxu0 0.0
    %793 = vmatpush1.msra.mxu0 0.0
    %794 = vmatprep.mubr.f32.mxu0 0.0
    %795 = vmatmul.mubr.f32.gmra.mrb[0].mxu0 %v728
    %v796 = vpop.f32.mrb[0].mxu0
    %v797 = vadd.f32 0.0, %v796
    %v798 = vpop.f32.mrb[0].mxu0
    %799 = vdwg.mxu0
    %v800 = vsub.f32 %v797, %v642
    %vm801 = vcmp.gt.f32.partialorder %v800, 1.0
    %v802 = vsel %vm801, 1, 0
    %v803 = vcvt.s32.f32 %v802
    %v804 = vrot.slane %v648, 6
    %v806 = vsub.f32 %v473, %v804
    %vm807 = vcmp.gt.f32.partialorder %v806, 1.0
    %v808 = vsel %vm807, 1, 0
    %v809 = vcvt.s32.f32 %v808
    %v811 = vrot.slane %v809, 4
    %v812 = vsel %vm488, %v811, 0
    %814 = vmatprep.subr.mxu0 0.0
    %815 = vmatpush1.msra.mxu0 %v149
    %816 = vmatprep.subr.mxu0 0.0
    %817 = vmatpush1.msra.mxu0 %v150
    %818 = vmatprep.subr.mxu0 0.0
    %819 = vmatpush1.msra.mxu0 %v151
    %820 = vmatprep.subr.mxu0 0.0
    %821 = vmatpush1.msra.mxu0 %v152
    %822 = vmatprep.subr.mxu0 0.0
    %823 = vmatpush1.msra.mxu0 0.0
    %824 = vmatprep.subr.mxu0 0.0
    %825 = vmatpush1.msra.mxu0 0.0
    %826 = vmatprep.subr.mxu0 0.0
    %827 = vmatpush1.msra.mxu0 0.0
    %828 = vmatprep.subr.mxu0 0.0
    %829 = vmatpush1.msra.mxu0 0.0
    %830 = vmatprep.subr.mxu0 0.0
    %831 = vmatpush1.msra.mxu0 0.0
    %832 = vmatprep.subr.mxu0 0.0
    %833 = vmatpush1.msra.mxu0 0.0
    %834 = vmatprep.subr.mxu0 0.0
    %835 = vmatpush1.msra.mxu0 0.0
    %836 = vmatprep.subr.mxu0 0.0
    %837 = vmatpush1.msra.mxu0 0.0
    %838 = vmatprep.subr.mxu0 0.0
    %839 = vmatpush1.msra.mxu0 0.0
    %840 = vmatprep.subr.mxu0 0.0
    %841 = vmatpush1.msra.mxu0 0.0
    %842 = vmatprep.subr.mxu0 0.0
    %843 = vmatpush1.msra.mxu0 0.0
    %844 = vmatprep.subr.mxu0 0.0
    %845 = vmatpush1.msra.mxu0 0.0
    %846 = vmatprep.subr.mxu0 0.0
    %847 = vmatpush1.msra.mxu0 0.0
    %848 = vmatprep.subr.mxu0 0.0
    %849 = vmatpush1.msra.mxu0 0.0
    %850 = vmatprep.subr.mxu0 0.0
    %851 = vmatpush1.msra.mxu0 0.0
    %852 = vmatprep.subr.mxu0 0.0
    %853 = vmatpush1.msra.mxu0 0.0
    %854 = vmatprep.subr.mxu0 0.0
    %855 = vmatpush1.msra.mxu0 0.0
    %856 = vmatprep.subr.mxu0 0.0
    %857 = vmatpush1.msra.mxu0 0.0
    %858 = vmatprep.subr.mxu0 0.0
    %859 = vmatpush1.msra.mxu0 0.0
    %860 = vmatprep.subr.mxu0 0.0
    %861 = vmatpush1.msra.mxu0 0.0
    %862 = vmatprep.subr.mxu0 0.0
    %863 = vmatpush1.msra.mxu0 0.0
    %864 = vmatprep.subr.mxu0 0.0
    %865 = vmatpush1.msra.mxu0 0.0
    %866 = vmatprep.subr.mxu0 0.0
    %867 = vmatpush1.msra.mxu0 0.0
    %868 = vmatprep.subr.mxu0 0.0
    %869 = vmatpush1.msra.mxu0 0.0
    %870 = vmatprep.subr.mxu0 0.0
    %871 = vmatpush1.msra.mxu0 0.0
    %872 = vmatprep.subr.mxu0 0.0
    %873 = vmatpush1.msra.mxu0 0.0
    %874 = vmatprep.subr.mxu0 0.0
    %875 = vmatpush1.msra.mxu0 0.0
    %876 = vmatprep.subr.mxu0 0.0
    %877 = vmatpush1.msra.mxu0 0.0
    %878 = vmatprep.mubr.f32.mxu0 0.0
    %879 = vmatmul.mubr.f32.gmra.mrb[0].mxu0 %v812
    %v880 = vpop.f32.mrb[0].mxu0
    %v881 = vadd.f32 0.0, %v880
    %v882 = vpop.f32.mrb[0].mxu0
    %883 = vdwg.mxu0
    %v884 = vsub.f32 %v881, %v726
    %vm885 = vcmp.gt.f32.partialorder %v884, 1.0
    %v886 = vsel %vm885, 1, 0
    %v887 = vcvt.s32.f32 %v886
    %v889 = vsel %vm488, %v887, 0
    %891 = vmatprep.subr.mxu0 0.0
    %892 = vmatpush1.msra.mxu0 %v153
    %893 = vmatprep.subr.mxu0 0.0
    %894 = vmatpush1.msra.mxu0 %v154
    %895 = vmatprep.subr.mxu0 0.0
    %896 = vmatpush1.msra.mxu0 %v155
    %897 = vmatprep.subr.mxu0 0.0
    %898 = vmatpush1.msra.mxu0 %v156
    %899 = vmatprep.subr.mxu0 0.0
    %900 = vmatpush1.msra.mxu0 0.0
    %901 = vmatprep.subr.mxu0 0.0
    %902 = vmatpush1.msra.mxu0 0.0
    %903 = vmatprep.subr.mxu0 0.0
    %904 = vmatpush1.msra.mxu0 0.0
    %905 = vmatprep.subr.mxu0 0.0
    %906 = vmatpush1.msra.mxu0 0.0
    %907 = vmatprep.subr.mxu0 0.0
    %908 = vmatpush1.msra.mxu0 0.0
    %909 = vmatprep.subr.mxu0 0.0
    %910 = vmatpush1.msra.mxu0 0.0
    %911 = vmatprep.subr.mxu0 0.0
    %912 = vmatpush1.msra.mxu0 0.0
    %913 = vmatprep.subr.mxu0 0.0
    %914 = vmatpush1.msra.mxu0 0.0
    %915 = vmatprep.subr.mxu0 0.0
    %916 = vmatpush1.msra.mxu0 0.0
    %917 = vmatprep.subr.mxu0 0.0
    %918 = vmatpush1.msra.mxu0 0.0
    %919 = vmatprep.subr.mxu0 0.0
    %920 = vmatpush1.msra.mxu0 0.0
    %921 = vmatprep.subr.mxu0 0.0
    %922 = vmatpush1.msra.mxu0 0.0
    %923 = vmatprep.subr.mxu0 0.0
    %924 = vmatpush1.msra.mxu0 0.0
    %925 = vmatprep.subr.mxu0 0.0
    %926 = vmatpush1.msra.mxu0 0.0
    %927 = vmatprep.subr.mxu0 0.0
    %928 = vmatpush1.msra.mxu0 0.0
    %929 = vmatprep.subr.mxu0 0.0
    %930 = vmatpush1.msra.mxu0 0.0
    %931 = vmatprep.subr.mxu0 0.0
    %932 = vmatpush1.msra.mxu0 0.0
    %933 = vmatprep.subr.mxu0 0.0
    %934 = vmatpush1.msra.mxu0 0.0
    %935 = vmatprep.subr.mxu0 0.0
    %936 = vmatpush1.msra.mxu0 0.0
    %937 = vmatprep.subr.mxu0 0.0
    %938 = vmatpush1.msra.mxu0 0.0
    %939 = vmatprep.subr.mxu0 0.0
    %940 = vmatpush1.msra.mxu0 0.0
    %941 = vmatprep.subr.mxu0 0.0
    %942 = vmatpush1.msra.mxu0 0.0
    %943 = vmatprep.subr.mxu0 0.0
    %944 = vmatpush1.msra.mxu0 0.0
    %945 = vmatprep.subr.mxu0 0.0
    %946 = vmatpush1.msra.mxu0 0.0
    %947 = vmatprep.subr.mxu0 0.0
    %948 = vmatpush1.msra.mxu0 0.0
    %949 = vmatprep.subr.mxu0 0.0
    %950 = vmatpush1.msra.mxu0 0.0
    %951 = vmatprep.subr.mxu0 0.0
    %952 = vmatpush1.msra.mxu0 0.0
    %953 = vmatprep.subr.mxu0 0.0
    %954 = vmatpush1.msra.mxu0 0.0
    %955 = vmatprep.mubr.f32.mxu0 0.0
    %956 = vmatmul.mubr.f32.gmra.mrb[0].mxu0 %v889
    %v957 = vpop.f32.mrb[0].mxu0
    %v958 = vadd.f32 0.0, %v957
    %v959 = vpop.f32.mrb[0].mxu0
    %960 = vdwg.mxu0
    %v961 = vsub.f32 %v958, %v803
    %vm962 = vcmp.gt.f32.partialorder %v961, 1.0
    %v963 = vsel %vm962, 1, 0
    %v964 = vcvt.s32.f32 %v963
    %v965 = vrot.slane %v809, 6
    %v967 = vsub.f32 %v473, %v965
    %vm968 = vcmp.gt.f32.partialorder %v967, 1.0
    %v969 = vsel %vm968, 1, 0
    %v970 = vcvt.s32.f32 %v969
    %v972 = vrot.slane %v970, 6
    %v973 = vsel %vm488, %v972, 0
    %975 = vmatprep.subr.mxu0 0.0
    %976 = vmatpush1.msra.mxu0 %v149
    %977 = vmatprep.subr.mxu0 0.0
    %978 = vmatpush1.msra.mxu0 %v150
    %979 = vmatprep.subr.mxu0 0.0
    %980 = vmatpush1.msra.mxu0 %v151
    %981 = vmatprep.subr.mxu0 0.0
    %982 = vmatpush1.msra.mxu0 %v152
    %983 = vmatprep.subr.mxu0 0.0
    %984 = vmatpush1.msra.mxu0 0.0
    %985 = vmatprep.subr.mxu0 0.0
    %986 = vmatpush1.msra.mxu0 0.0
    %987 = vmatprep.subr.mxu0 0.0
    %988 = vmatpush1.msra.mxu0 0.0
    %989 = vmatprep.subr.mxu0 0.0
    %990 = vmatpush1.msra.mxu0 0.0
    %991 = vmatprep.subr.mxu0 0.0
    %992 = vmatpush1.msra.mxu0 0.0
    %993 = vmatprep.subr.mxu0 0.0
    %994 = vmatpush1.msra.mxu0 0.0
    %995 = vmatprep.subr.mxu0 0.0
    %996 = vmatpush1.msra.mxu0 0.0
    %997 = vmatprep.subr.mxu0 0.0
    %998 = vmatpush1.msra.mxu0 0.0
    %999 = vmatprep.subr.mxu0 0.0
    %1000 = vmatpush1.msra.mxu0 0.0
    %1001 = vmatprep.subr.mxu0 0.0
    %1002 = vmatpush1.msra.mxu0 0.0
    %1003 = vmatprep.subr.mxu0 0.0
    %1004 = vmatpush1.msra.mxu0 0.0
    %1005 = vmatprep.subr.mxu0 0.0
    %1006 = vmatpush1.msra.mxu0 0.0
    %1007 = vmatprep.subr.mxu0 0.0
    %1008 = vmatpush1.msra.mxu0 0.0
    %1009 = vmatprep.subr.mxu0 0.0
    %1010 = vmatpush1.msra.mxu0 0.0
    %1011 = vmatprep.subr.mxu0 0.0
    %1012 = vmatpush1.msra.mxu0 0.0
    %1013 = vmatprep.subr.mxu0 0.0
    %1014 = vmatpush1.msra.mxu0 0.0
    %1015 = vmatprep.subr.mxu0 0.0
    %1016 = vmatpush1.msra.mxu0 0.0
    %1017 = vmatprep.subr.mxu0 0.0
    %1018 = vmatpush1.msra.mxu0 0.0
    %1019 = vmatprep.subr.mxu0 0.0
    %1020 = vmatpush1.msra.mxu0 0.0
    %1021 = vmatprep.subr.mxu0 0.0
    %1022 = vmatpush1.msra.mxu0 0.0
    %1023 = vmatprep.subr.mxu0 0.0
    %1024 = vmatpush1.msra.mxu0 0.0
    %1025 = vmatprep.subr.mxu0 0.0
    %1026 = vmatpush1.msra.mxu0 0.0
    %1027 = vmatprep.subr.mxu0 0.0
    %1028 = vmatpush1.msra.mxu0 0.0
    %1029 = vmatprep.subr.mxu0 0.0
    %1030 = vmatpush1.msra.mxu0 0.0
    %1031 = vmatprep.subr.mxu0 0.0
    %1032 = vmatpush1.msra.mxu0 0.0
    %1033 = vmatprep.subr.mxu0 0.0
    %1034 = vmatpush1.msra.mxu0 0.0
    %1035 = vmatprep.subr.mxu0 0.0
    %1036 = vmatpush1.msra.mxu0 0.0
    %1037 = vmatprep.subr.mxu0 0.0
    %1038 = vmatpush1.msra.mxu0 0.0
    %1039 = vmatprep.mubr.f32.mxu0 0.0
    %1040 = vmatmul.mubr.f32.gmra.mrb[0].mxu0 %v973
    %v1041 = vpop.f32.mrb[0].mxu0
    %v1042 = vadd.f32 0.0, %v1041
    %v1043 = vpop.f32.mrb[0].mxu0
    %1044 = vdwg.mxu0
    %v1045 = vsub.f32 %v1042, %v887
    %vm1046 = vcmp.gt.f32.partialorder %v1045, 1.0
    %v1047 = vsel %vm1046, 1, 0
    %v1048 = vcvt.s32.f32 %v1047
    %v1050 = vsel %vm488, %v1048, 0
    %1052 = vmatprep.subr.mxu0 0.0
    %1053 = vmatpush1.msra.mxu0 %v153
    %1054 = vmatprep.subr.mxu0 0.0
    %1055 = vmatpush1.msra.mxu0 %v154
    %1056 = vmatprep.subr.mxu0 0.0
    %1057 = vmatpush1.msra.mxu0 %v155
    %1058 = vmatprep.subr.mxu0 0.0
    %1059 = vmatpush1.msra.mxu0 %v156
    %1060 = vmatprep.subr.mxu0 0.0
    %1061 = vmatpush1.msra.mxu0 0.0
    %1062 = vmatprep.subr.mxu0 0.0
    %1063 = vmatpush1.msra.mxu0 0.0
    %1064 = vmatprep.subr.mxu0 0.0
    %1065 = vmatpush1.msra.mxu0 0.0
    %1066 = vmatprep.subr.mxu0 0.0
    %1067 = vmatpush1.msra.mxu0 0.0
    %1068 = vmatprep.subr.mxu0 0.0
    %1069 = vmatpush1.msra.mxu0 0.0
    %1070 = vmatprep.subr.mxu0 0.0
    %1071 = vmatpush1.msra.mxu0 0.0
    %1072 = vmatprep.subr.mxu0 0.0
    %1073 = vmatpush1.msra.mxu0 0.0
    %1074 = vmatprep.subr.mxu0 0.0
    %1075 = vmatpush1.msra.mxu0 0.0
    %1076 = vmatprep.subr.mxu0 0.0
    %1077 = vmatpush1.msra.mxu0 0.0
    %1078 = vmatprep.subr.mxu0 0.0
    %1079 = vmatpush1.msra.mxu0 0.0
    %1080 = vmatprep.subr.mxu0 0.0
    %1081 = vmatpush1.msra.mxu0 0.0
    %1082 = vmatprep.subr.mxu0 0.0
    %1083 = vmatpush1.msra.mxu0 0.0
    %1084 = vmatprep.subr.mxu0 0.0
    %1085 = vmatpush1.msra.mxu0 0.0
    %1086 = vmatprep.subr.mxu0 0.0
    %1087 = vmatpush1.msra.mxu0 0.0
    %1088 = vmatprep.subr.mxu0 0.0
    %1089 = vmatpush1.msra.mxu0 0.0
    %1090 = vmatprep.subr.mxu0 0.0
    %1091 = vmatpush1.msra.mxu0 0.0
    %1092 = vmatprep.subr.mxu0 0.0
    %1093 = vmatpush1.msra.mxu0 0.0
    %1094 = vmatprep.subr.mxu0 0.0
    %1095 = vmatpush1.msra.mxu0 0.0
    %1096 = vmatprep.subr.mxu0 0.0
    %1097 = vmatpush1.msra.mxu0 0.0
    %1098 = vmatprep.subr.mxu0 0.0
    %1099 = vmatpush1.msra.mxu0 0.0
    %1100 = vmatprep.subr.mxu0 0.0
    %1101 = vmatpush1.msra.mxu0 0.0
    %1102 = vmatprep.subr.mxu0 0.0
    %1103 = vmatpush1.msra.mxu0 0.0
    %1104 = vmatprep.subr.mxu0 0.0
    %1105 = vmatpush1.msra.mxu0 0.0
    %1106 = vmatprep.subr.mxu0 0.0
    %1107 = vmatpush1.msra.mxu0 0.0
    %1108 = vmatprep.subr.mxu0 0.0
    %1109 = vmatpush1.msra.mxu0 0.0
    %1110 = vmatprep.subr.mxu0 0.0
    %1111 = vmatpush1.msra.mxu0 0.0
    %1112 = vmatprep.subr.mxu0 0.0
    %1113 = vmatpush1.msra.mxu0 0.0
    %1114 = vmatprep.subr.mxu0 0.0
    %1115 = vmatpush1.msra.mxu0 0.0
    %1116 = vmatprep.mubr.f32.mxu0 0.0
    %1117 = vmatmul.mubr.f32.gmra.mrb[0].mxu0 %v1050
    %v1118 = vpop.f32.mrb[0].mxu0
    %v1119 = vadd.f32 0.0, %v1118
    %v1120 = vpop.f32.mrb[0].mxu0
    %1121 = vdwg.mxu0
    %v1122 = vsub.f32 %v1119, %v964
    %vm1123 = vcmp.gt.f32.partialorder %v1122, 1.0
    %v1124 = vsel %vm1123, 1, 0
    %v1125 = vcvt.s32.f32 %v1124
    %v1127 = vsub.f32 %v478, %v972
    %vm1128 = vcmp.gt.f32.partialorder %v1127, 1.0
    %v1129 = vsel %vm1128, 1, 0
    %v1130 = vcvt.s32.f32 %v1129
    %v1132 = vsel %vm488, %v1130, 0
    %1134 = vmatprep.subr.mxu0 0.0
    %1135 = vmatpush1.msra.mxu0 %v149
    %1136 = vmatprep.subr.mxu0 0.0
    %1137 = vmatpush1.msra.mxu0 %v150
    %1138 = vmatprep.subr.mxu0 0.0
    %1139 = vmatpush1.msra.mxu0 %v151
    %1140 = vmatprep.subr.mxu0 0.0
    %1141 = vmatpush1.msra.mxu0 %v152
    %1142 = vmatprep.subr.mxu0 0.0
    %1143 = vmatpush1.msra.mxu0 0.0
    %1144 = vmatprep.subr.mxu0 0.0
    %1145 = vmatpush1.msra.mxu0 0.0
    %1146 = vmatprep.subr.mxu0 0.0
    %1147 = vmatpush1.msra.mxu0 0.0
    %1148 = vmatprep.subr.mxu0 0.0
    %1149 = vmatpush1.msra.mxu0 0.0
    %1150 = vmatprep.subr.mxu0 0.0
    %1151 = vmatpush1.msra.mxu0 0.0
    %1152 = vmatprep.subr.mxu0 0.0
    %1153 = vmatpush1.msra.mxu0 0.0
    %1154 = vmatprep.subr.mxu0 0.0
    %1155 = vmatpush1.msra.mxu0 0.0
    %1156 = vmatprep.subr.mxu0 0.0
    %1157 = vmatpush1.msra.mxu0 0.0
    %1158 = vmatprep.subr.mxu0 0.0
    %1159 = vmatpush1.msra.mxu0 0.0
    %1160 = vmatprep.subr.mxu0 0.0
    %1161 = vmatpush1.msra.mxu0 0.0
    %1162 = vmatprep.subr.mxu0 0.0
    %1163 = vmatpush1.msra.mxu0 0.0
    %1164 = vmatprep.subr.mxu0 0.0
    %1165 = vmatpush1.msra.mxu0 0.0
    %1166 = vmatprep.subr.mxu0 0.0
    %1167 = vmatpush1.msra.mxu0 0.0
    %1168 = vmatprep.subr.mxu0 0.0
    %1169 = vmatpush1.msra.mxu0 0.0
    %1170 = vmatprep.subr.mxu0 0.0
    %1171 = vmatpush1.msra.mxu0 0.0
    %1172 = vmatprep.subr.mxu0 0.0
    %1173 = vmatpush1.msra.mxu0 0.0
    %1174 = vmatprep.subr.mxu0 0.0
    %1175 = vmatpush1.msra.mxu0 0.0
    %1176 = vmatprep.subr.mxu0 0.0
    %1177 = vmatpush1.msra.mxu0 0.0
    %1178 = vmatprep.subr.mxu0 0.0
    %1179 = vmatpush1.msra.mxu0 0.0
    %1180 = vmatprep.subr.mxu0 0.0
    %1181 = vmatpush1.msra.mxu0 0.0
    %1182 = vmatprep.subr.mxu0 0.0
    %1183 = vmatpush1.msra.mxu0 0.0
    %1184 = vmatprep.subr.mxu0 0.0
    %1185 = vmatpush1.msra.mxu0 0.0
    %1186 = vmatprep.subr.mxu0 0.0
    %1187 = vmatpush1.msra.mxu0 0.0
    %1188 = vmatprep.subr.mxu0 0.0
    %1189 = vmatpush1.msra.mxu0 0.0
    %1190 = vmatprep.subr.mxu0 0.0
    %1191 = vmatpush1.msra.mxu0 0.0
    %1192 = vmatprep.subr.mxu0 0.0
    %1193 = vmatpush1.msra.mxu0 0.0
    %1194 = vmatprep.subr.mxu0 0.0
    %1195 = vmatpush1.msra.mxu0 0.0
    %1196 = vmatprep.subr.mxu0 0.0
    %1197 = vmatpush1.msra.mxu0 0.0
    %1198 = vmatprep.mubr.f32.mxu0 0.0
    %1199 = vmatmul.mubr.f32.gmra.mrb[0].mxu0 %v1132
    %v1200 = vpop.f32.mrb[0].mxu0
    %v1201 = vadd.f32 0.0, %v1200
    %v1202 = vpop.f32.mrb[0].mxu0
    %1203 = vdwg.mxu0
    %v1204 = vsub.f32 %v1201, %v1048
    %vm1205 = vcmp.gt.f32.partialorder %v1204, 1.0
    %v1206 = vsel %vm1205, 1, 0
    %v1207 = vcvt.s32.f32 %v1206
    %v1209 = vsel %vm488, %v1207, 0
    %1211 = vmatprep.subr.mxu0 0.0
    %1212 = vmatpush1.msra.mxu0 %v153
    %1213 = vmatprep.subr.mxu0 0.0
    %1214 = vmatpush1.msra.mxu0 %v154
    %1215 = vmatprep.subr.mxu0 0.0
    %1216 = vmatpush1.msra.mxu0 %v155
    %1217 = vmatprep.subr.mxu0 0.0
    %1218 = vmatpush1.msra.mxu0 %v156
    %1219 = vmatprep.subr.mxu0 0.0
    %1220 = vmatpush1.msra.mxu0 0.0
    %1221 = vmatprep.subr.mxu0 0.0
    %1222 = vmatpush1.msra.mxu0 0.0
    %1223 = vmatprep.subr.mxu0 0.0
    %1224 = vmatpush1.msra.mxu0 0.0
    %1225 = vmatprep.subr.mxu0 0.0
    %1226 = vmatpush1.msra.mxu0 0.0
    %1227 = vmatprep.subr.mxu0 0.0
    %1228 = vmatpush1.msra.mxu0 0.0
    %1229 = vmatprep.subr.mxu0 0.0
    %1230 = vmatpush1.msra.mxu0 0.0
    %1231 = vmatprep.subr.mxu0 0.0
    %1232 = vmatpush1.msra.mxu0 0.0
    %1233 = vmatprep.subr.mxu0 0.0
    %1234 = vmatpush1.msra.mxu0 0.0
    %1235 = vmatprep.subr.mxu0 0.0
    %1236 = vmatpush1.msra.mxu0 0.0
    %1237 = vmatprep.subr.mxu0 0.0
    %1238 = vmatpush1.msra.mxu0 0.0
    %1239 = vmatprep.subr.mxu0 0.0
    %1240 = vmatpush1.msra.mxu0 0.0
    %1241 = vmatprep.subr.mxu0 0.0
    %1242 = vmatpush1.msra.mxu0 0.0
    %1243 = vmatprep.subr.mxu0 0.0
    %1244 = vmatpush1.msra.mxu0 0.0
    %1245 = vmatprep.subr.mxu0 0.0
    %1246 = vmatpush1.msra.mxu0 0.0
    %1247 = vmatprep.subr.mxu0 0.0
    %1248 = vmatpush1.msra.mxu0 0.0
    %1249 = vmatprep.subr.mxu0 0.0
    %1250 = vmatpush1.msra.mxu0 0.0
    %1251 = vmatprep.subr.mxu0 0.0
    %1252 = vmatpush1.msra.mxu0 0.0
    %1253 = vmatprep.subr.mxu0 0.0
    %1254 = vmatpush1.msra.mxu0 0.0
    %1255 = vmatprep.subr.mxu0 0.0
    %1256 = vmatpush1.msra.mxu0 0.0
    %1257 = vmatprep.subr.mxu0 0.0
    %1258 = vmatpush1.msra.mxu0 0.0
    %1259 = vmatprep.subr.mxu0 0.0
    %1260 = vmatpush1.msra.mxu0 0.0
    %1261 = vmatprep.subr.mxu0 0.0
    %1262 = vmatpush1.msra.mxu0 0.0
    %1263 = vmatprep.subr.mxu0 0.0
    %1264 = vmatpush1.msra.mxu0 0.0
    %1265 = vmatprep.subr.mxu0 0.0
    %1266 = vmatpush1.msra.mxu0 0.0
    %1267 = vmatprep.subr.mxu0 0.0
    %1268 = vmatpush1.msra.mxu0 0.0
    %1269 = vmatprep.subr.mxu0 0.0
    %1270 = vmatpush1.msra.mxu0 0.0
    %1271 = vmatprep.subr.mxu0 0.0
    %1272 = vmatpush1.msra.mxu0 0.0
    %1273 = vmatprep.subr.mxu0 0.0
    %1274 = vmatpush1.msra.mxu0 0.0
    %1275 = vmatprep.mubr.f32.mxu0 0.0
    %1276 = vmatmul.mubr.f32.gmra.mrb[0].mxu0 %v1209
    %v1277 = vpop.f32.mrb[0].mxu0
    %v1278 = vadd.f32 0.0, %v1277
    %v1279 = vpop.f32.mrb[0].mxu0
    %1280 = vdwg.mxu0
    %v1281 = vsub.f32 %v1278, %v1125
    %vm1282 = vcmp.gt.f32.partialorder %v1281, 1.0
    %v1283 = vsel %vm1282, 1, 0
    %v1284 = vcvt.s32.f32 %v1283
    %v1285 = vrot.slane %v1130, 6
    %v1287 = vsub.f32 %v478, %v1285
    %vm1288 = vcmp.gt.f32.partialorder %v1287, 1.0
    %v1289 = vsel %vm1288, 1, 0
    %v1290 = vcvt.s32.f32 %v1289
    %v1292 = vrot.slane %v1290, 2
    %v1293 = vsel %vm488, %v1292, 0
    %1295 = vmatprep.subr.mxu0 0.0
    %1296 = vmatpush1.msra.mxu0 %v149
    %1297 = vmatprep.subr.mxu0 0.0
    %1298 = vmatpush1.msra.mxu0 %v150
    %1299 = vmatprep.subr.mxu0 0.0
    %1300 = vmatpush1.msra.mxu0 %v151
    %1301 = vmatprep.subr.mxu0 0.0
    %1302 = vmatpush1.msra.mxu0 %v152
    %1303 = vmatprep.subr.mxu0 0.0
    %1304 = vmatpush1.msra.mxu0 0.0
    %1305 = vmatprep.subr.mxu0 0.0
    %1306 = vmatpush1.msra.mxu0 0.0
    %1307 = vmatprep.subr.mxu0 0.0
    %1308 = vmatpush1.msra.mxu0 0.0
    %1309 = vmatprep.subr.mxu0 0.0
    %1310 = vmatpush1.msra.mxu0 0.0
    %1311 = vmatprep.subr.mxu0 0.0
    %1312 = vmatpush1.msra.mxu0 0.0
    %1313 = vmatprep.subr.mxu0 0.0
    %1314 = vmatpush1.msra.mxu0 0.0
    %1315 = vmatprep.subr.mxu0 0.0
    %1316 = vmatpush1.msra.mxu0 0.0
    %1317 = vmatprep.subr.mxu0 0.0
    %1318 = vmatpush1.msra.mxu0 0.0
    %1319 = vmatprep.subr.mxu0 0.0
    %1320 = vmatpush1.msra.mxu0 0.0
    %1321 = vmatprep.subr.mxu0 0.0
    %1322 = vmatpush1.msra.mxu0 0.0
    %1323 = vmatprep.subr.mxu0 0.0
    %1324 = vmatpush1.msra.mxu0 0.0
    %1325 = vmatprep.subr.mxu0 0.0
    %1326 = vmatpush1.msra.mxu0 0.0
    %1327 = vmatprep.subr.mxu0 0.0
    %1328 = vmatpush1.msra.mxu0 0.0
    %1329 = vmatprep.subr.mxu0 0.0
    %1330 = vmatpush1.msra.mxu0 0.0
    %1331 = vmatprep.subr.mxu0 0.0
    %1332 = vmatpush1.msra.mxu0 0.0
    %1333 = vmatprep.subr.mxu0 0.0
    %1334 = vmatpush1.msra.mxu0 0.0
    %1335 = vmatprep.subr.mxu0 0.0
    %1336 = vmatpush1.msra.mxu0 0.0
    %1337 = vmatprep.subr.mxu0 0.0
    %1338 = vmatpush1.msra.mxu0 0.0
    %1339 = vmatprep.subr.mxu0 0.0
    %1340 = vmatpush1.msra.mxu0 0.0
    %1341 = vmatprep.subr.mxu0 0.0
    %1342 = vmatpush1.msra.mxu0 0.0
    %1343 = vmatprep.subr.mxu0 0.0
    %1344 = vmatpush1.msra.mxu0 0.0
    %1345 = vmatprep.subr.mxu0 0.0
    %1346 = vmatpush1.msra.mxu0 0.0
    %1347 = vmatprep.subr.mxu0 0.0
    %1348 = vmatpush1.msra.mxu0 0.0
    %1349 = vmatprep.subr.mxu0 0.0
    %1350 = vmatpush1.msra.mxu0 0.0
    %1351 = vmatprep.subr.mxu0 0.0
    %1352 = vmatpush1.msra.mxu0 0.0
    %1353 = vmatprep.subr.mxu0 0.0
    %1354 = vmatpush1.msra.mxu0 0.0
    %1355 = vmatprep.subr.mxu0 0.0
    %1356 = vmatpush1.msra.mxu0 0.0
    %1357 = vmatprep.subr.mxu0 0.0
    %1358 = vmatpush1.msra.mxu0 0.0
    %1359 = vmatprep.mubr.f32.mxu0 0.0
    %1360 = vmatmul.mubr.f32.gmra.mrb[0].mxu0 %v1293
    %v1361 = vpop.f32.mrb[0].mxu0
    %v1362 = vadd.f32 0.0, %v1361
    %v1363 = vpop.f32.mrb[0].mxu0
    %1364 = vdwg.mxu0
    %v1365 = vsub.f32 %v1362, %v1207
    %vm1366 = vcmp.gt.f32.partialorder %v1365, 1.0
    %v1367 = vsel %vm1366, 1, 0
    %v1368 = vcvt.s32.f32 %v1367
    %v1370 = vsel %vm488, %v1368, 0
    %1372 = vmatprep.subr.mxu0 0.0
    %1373 = vmatpush1.msra.mxu0 %v153
    %1374 = vmatprep.subr.mxu0 0.0
    %1375 = vmatpush1.msra.mxu0 %v154
    %1376 = vmatprep.subr.mxu0 0.0
    %1377 = vmatpush1.msra.mxu0 %v155
    %1378 = vmatprep.subr.mxu0 0.0
    %1379 = vmatpush1.msra.mxu0 %v156
    %1380 = vmatprep.subr.mxu0 0.0
    %1381 = vmatpush1.msra.mxu0 0.0
    %1382 = vmatprep.subr.mxu0 0.0
    %1383 = vmatpush1.msra.mxu0 0.0
    %1384 = vmatprep.subr.mxu0 0.0
    %1385 = vmatpush1.msra.mxu0 0.0
    %1386 = vmatprep.subr.mxu0 0.0
    %1387 = vmatpush1.msra.mxu0 0.0
    %1388 = vmatprep.subr.mxu0 0.0
    %1389 = vmatpush1.msra.mxu0 0.0
    %1390 = vmatprep.subr.mxu0 0.0
    %1391 = vmatpush1.msra.mxu0 0.0
    %1392 = vmatprep.subr.mxu0 0.0
    %1393 = vmatpush1.msra.mxu0 0.0
    %1394 = vmatprep.subr.mxu0 0.0
    %1395 = vmatpush1.msra.mxu0 0.0
    %1396 = vmatprep.subr.mxu0 0.0
    %1397 = vmatpush1.msra.mxu0 0.0
    %1398 = vmatprep.subr.mxu0 0.0
    %1399 = vmatpush1.msra.mxu0 0.0
    %1400 = vmatprep.subr.mxu0 0.0
    %1401 = vmatpush1.msra.mxu0 0.0
    %1402 = vmatprep.subr.mxu0 0.0
    %1403 = vmatpush1.msra.mxu0 0.0
    %1404 = vmatprep.subr.mxu0 0.0
    %1405 = vmatpush1.msra.mxu0 0.0
    %1406 = vmatprep.subr.mxu0 0.0
    %1407 = vmatpush1.msra.mxu0 0.0
    %1408 = vmatprep.subr.mxu0 0.0
    %1409 = vmatpush1.msra.mxu0 0.0
    %1410 = vmatprep.subr.mxu0 0.0
    %1411 = vmatpush1.msra.mxu0 0.0
    %1412 = vmatprep.subr.mxu0 0.0
    %1413 = vmatpush1.msra.mxu0 0.0
    %1414 = vmatprep.subr.mxu0 0.0
    %1415 = vmatpush1.msra.mxu0 0.0
    %1416 = vmatprep.subr.mxu0 0.0
    %1417 = vmatpush1.msra.mxu0 0.0
    %1418 = vmatprep.subr.mxu0 0.0
    %1419 = vmatpush1.msra.mxu0 0.0
    %1420 = vmatprep.subr.mxu0 0.0
    %1421 = vmatpush1.msra.mxu0 0.0
    %1422 = vmatprep.subr.mxu0 0.0
    %1423 = vmatpush1.msra.mxu0 0.0
    %1424 = vmatprep.subr.mxu0 0.0
    %1425 = vmatpush1.msra.mxu0 0.0
    %1426 = vmatprep.subr.mxu0 0.0
    %1427 = vmatpush1.msra.mxu0 0.0
    %1428 = vmatprep.subr.mxu0 0.0
    %1429 = vmatpush1.msra.mxu0 0.0
    %1430 = vmatprep.subr.mxu0 0.0
    %1431 = vmatpush1.msra.mxu0 0.0
    %1432 = vmatprep.subr.mxu0 0.0
    %1433 = vmatpush1.msra.mxu0 0.0
    %1434 = vmatprep.subr.mxu0 0.0
    %1435 = vmatpush1.msra.mxu0 0.0
    %1436 = vmatprep.mubr.f32.mxu0 0.0
    %1437 = vmatmul.mubr.f32.gmra.mrb[0].mxu0 %v1370
    %v1438 = vpop.f32.mrb[0].mxu0
    %v1439 = vadd.f32 0.0, %v1438
    %v1440 = vpop.f32.mrb[0].mxu0
    %1441 = vdwg.mxu0
    %v1442 = vsub.f32 %v1439, %v1284
    %vm1443 = vcmp.gt.f32.partialorder %v1442, 1.0
    %v1444 = vsel %vm1443, 1, 0
    %v1445 = vcvt.s32.f32 %v1444
    %v1446 = vrot.slane %v1290, 6
    %v1448 = vsub.f32 %v478, %v1446
    %vm1449 = vcmp.gt.f32.partialorder %v1448, 1.0
    %v1450 = vsel %vm1449, 1, 0
    %v1451 = vcvt.s32.f32 %v1450
    %v1453 = vrot.slane %v1451, 4
    %v1454 = vsel %vm488, %v1453, 0
    %1456 = vmatprep.subr.mxu0 0.0
    %1457 = vmatpush1.msra.mxu0 %v149
    %1458 = vmatprep.subr.mxu0 0.0
    %1459 = vmatpush1.msra.mxu0 %v150
    %1460 = vmatprep.subr.mxu0 0.0
    %1461 = vmatpush1.msra.mxu0 %v151
    %1462 = vmatprep.subr.mxu0 0.0
    %1463 = vmatpush1.msra.mxu0 %v152
    %1464 = vmatprep.subr.mxu0 0.0
    %1465 = vmatpush1.msra.mxu0 0.0
    %1466 = vmatprep.subr.mxu0 0.0
    %1467 = vmatpush1.msra.mxu0 0.0
    %1468 = vmatprep.subr.mxu0 0.0
    %1469 = vmatpush1.msra.mxu0 0.0
    %1470 = vmatprep.subr.mxu0 0.0
    %1471 = vmatpush1.msra.mxu0 0.0
    %1472 = vmatprep.subr.mxu0 0.0
    %1473 = vmatpush1.msra.mxu0 0.0
    %1474 = vmatprep.subr.mxu0 0.0
    %1475 = vmatpush1.msra.mxu0 0.0
    %1476 = vmatprep.subr.mxu0 0.0
    %1477 = vmatpush1.msra.mxu0 0.0
    %1478 = vmatprep.subr.mxu0 0.0
    %1479 = vmatpush1.msra.mxu0 0.0
    %1480 = vmatprep.subr.mxu0 0.0
    %1481 = vmatpush1.msra.mxu0 0.0
    %1482 = vmatprep.subr.mxu0 0.0
    %1483 = vmatpush1.msra.mxu0 0.0
    %1484 = vmatprep.subr.mxu0 0.0
    %1485 = vmatpush1.msra.mxu0 0.0
    %1486 = vmatprep.subr.mxu0 0.0
    %1487 = vmatpush1.msra.mxu0 0.0
    %1488 = vmatprep.subr.mxu0 0.0
    %1489 = vmatpush1.msra.mxu0 0.0
    %1490 = vmatprep.subr.mxu0 0.0
    %1491 = vmatpush1.msra.mxu0 0.0
    %1492 = vmatprep.subr.mxu0 0.0
    %1493 = vmatpush1.msra.mxu0 0.0
    %1494 = vmatprep.subr.mxu0 0.0
    %1495 = vmatpush1.msra.mxu0 0.0
    %1496 = vmatprep.subr.mxu0 0.0
    %1497 = vmatpush1.msra.mxu0 0.0
    %1498 = vmatprep.subr.mxu0 0.0
    %1499 = vmatpush1.msra.mxu0 0.0
    %1500 = vmatprep.subr.mxu0 0.0
    %1501 = vmatpush1.msra.mxu0 0.0
    %1502 = vmatprep.subr.mxu0 0.0
    %1503 = vmatpush1.msra.mxu0 0.0
    %1504 = vmatprep.subr.mxu0 0.0
    %1505 = vmatpush1.msra.mxu0 0.0
    %1506 = vmatprep.subr.mxu0 0.0
    %1507 = vmatpush1.msra.mxu0 0.0
    %1508 = vmatprep.subr.mxu0 0.0
    %1509 = vmatpush1.msra.mxu0 0.0
    %1510 = vmatprep.subr.mxu0 0.0
    %1511 = vmatpush1.msra.mxu0 0.0
    %1512 = vmatprep.subr.mxu0 0.0
    %1513 = vmatpush1.msra.mxu0 0.0
    %1514 = vmatprep.subr.mxu0 0.0
    %1515 = vmatpush1.msra.mxu0 0.0
    %1516 = vmatprep.subr.mxu0 0.0
    %1517 = vmatpush1.msra.mxu0 0.0
    %1518 = vmatprep.subr.mxu0 0.0
    %1519 = vmatpush1.msra.mxu0 0.0
    %1520 = vmatprep.mubr.f32.mxu0 0.0
    %1521 = vmatmul.mubr.f32.gmra.mrb[0].mxu0 %v1454
    %v1522 = vpop.f32.mrb[0].mxu0
    %v1523 = vadd.f32 0.0, %v1522
    %v1524 = vpop.f32.mrb[0].mxu0
    %1525 = vdwg.mxu0
    %v1526 = vsub.f32 %v1523, %v1368
    %vm1527 = vcmp.gt.f32.partialorder %v1526, 1.0
    %v1528 = vsel %vm1527, 1, 0
    %v1529 = vcvt.s32.f32 %v1528
    %v1531 = vsel %vm488, %v1529, 0
    %1533 = vmatprep.subr.mxu0 0.0
    %1534 = vmatpush1.msra.mxu0 %v153
    %1535 = vmatprep.subr.mxu0 0.0
    %1536 = vmatpush1.msra.mxu0 %v154
    %1537 = vmatprep.subr.mxu0 0.0
    %1538 = vmatpush1.msra.mxu0 %v155
    %1539 = vmatprep.subr.mxu0 0.0
    %1540 = vmatpush1.msra.mxu0 %v156
    %1541 = vmatprep.subr.mxu0 0.0
    %1542 = vmatpush1.msra.mxu0 0.0
    %1543 = vmatprep.subr.mxu0 0.0
    %1544 = vmatpush1.msra.mxu0 0.0
    %1545 = vmatprep.subr.mxu0 0.0
    %1546 = vmatpush1.msra.mxu0 0.0
    %1547 = vmatprep.subr.mxu0 0.0
    %1548 = vmatpush1.msra.mxu0 0.0
    %1549 = vmatprep.subr.mxu0 0.0
    %1550 = vmatpush1.msra.mxu0 0.0
    %1551 = vmatprep.subr.mxu0 0.0
    %1552 = vmatpush1.msra.mxu0 0.0
    %1553 = vmatprep.subr.mxu0 0.0
    %1554 = vmatpush1.msra.mxu0 0.0
    %1555 = vmatprep.subr.mxu0 0.0
    %1556 = vmatpush1.msra.mxu0 0.0
    %1557 = vmatprep.subr.mxu0 0.0
    %1558 = vmatpush1.msra.mxu0 0.0
    %1559 = vmatprep.subr.mxu0 0.0
    %1560 = vmatpush1.msra.mxu0 0.0
    %1561 = vmatprep.subr.mxu0 0.0
    %1562 = vmatpush1.msra.mxu0 0.0
    %1563 = vmatprep.subr.mxu0 0.0
    %1564 = vmatpush1.msra.mxu0 0.0
    %1565 = vmatprep.subr.mxu0 0.0
    %1566 = vmatpush1.msra.mxu0 0.0
    %1567 = vmatprep.subr.mxu0 0.0
    %1568 = vmatpush1.msra.mxu0 0.0
    %1569 = vmatprep.subr.mxu0 0.0
    %1570 = vmatpush1.msra.mxu0 0.0
    %1571 = vmatprep.subr.mxu0 0.0
    %1572 = vmatpush1.msra.mxu0 0.0
    %1573 = vmatprep.subr.mxu0 0.0
    %1574 = vmatpush1.msra.mxu0 0.0
    %1575 = vmatprep.subr.mxu0 0.0
    %1576 = vmatpush1.msra.mxu0 0.0
    %1577 = vmatprep.subr.mxu0 0.0
    %1578 = vmatpush1.msra.mxu0 0.0
    %1579 = vmatprep.subr.mxu0 0.0
    %1580 = vmatpush1.msra.mxu0 0.0
    %1581 = vmatprep.subr.mxu0 0.0
    %1582 = vmatpush1.msra.mxu0 0.0
    %1583 = vmatprep.subr.mxu0 0.0
    %1584 = vmatpush1.msra.mxu0 0.0
    %1585 = vmatprep.subr.mxu0 0.0
    %1586 = vmatpush1.msra.mxu0 0.0
    %1587 = vmatprep.subr.mxu0 0.0
    %1588 = vmatpush1.msra.mxu0 0.0
    %1589 = vmatprep.subr.mxu0 0.0
    %1590 = vmatpush1.msra.mxu0 0.0
    %1591 = vmatprep.subr.mxu0 0.0
    %1592 = vmatpush1.msra.mxu0 0.0
    %1593 = vmatprep.subr.mxu0 0.0
    %1594 = vmatpush1.msra.mxu0 0.0
    %1595 = vmatprep.subr.mxu0 0.0
    %1596 = vmatpush1.msra.mxu0 0.0
    %1597 = vmatprep.mubr.f32.mxu0 0.0
    %1598 = vmatmul.mubr.f32.gmra.mrb[0].mxu0 %v1531
    %v1599 = vpop.f32.mrb[0].mxu0
    %v1600 = vadd.f32 0.0, %v1599
    %v1601 = vpop.f32.mrb[0].mxu0
    %1602 = vdwg.mxu0
    %v1603 = vsub.f32 %v1600, %v1445
    %vm1604 = vcmp.gt.f32.partialorder %v1603, 1.0
    %v1605 = vsel %vm1604, 1, 0
    %v1606 = vcvt.s32.f32 %v1605
    %v1607 = vrot.slane %v1451, 6
    %v1609 = vsub.f32 %v478, %v1607
    %vm1610 = vcmp.gt.f32.partialorder %v1609, 1.0
    %v1611 = vsel %vm1610, 1, 0
    %v1612 = vcvt.s32.f32 %v1611
    %v1614 = vrot.slane %v1612, 6
    %v1615 = vsel %vm488, %v1614, 0
    %1617 = vmatprep.subr.mxu0 0.0
    %1618 = vmatpush1.msra.mxu0 %v149
    %1619 = vmatprep.subr.mxu0 0.0
    %1620 = vmatpush1.msra.mxu0 %v150
    %1621 = vmatprep.subr.mxu0 0.0
    %1622 = vmatpush1.msra.mxu0 %v151
    %1623 = vmatprep.subr.mxu0 0.0
    %1624 = vmatpush1.msra.mxu0 %v152
    %1625 = vmatprep.subr.mxu0 0.0
    %1626 = vmatpush1.msra.mxu0 0.0
    %1627 = vmatprep.subr.mxu0 0.0
    %1628 = vmatpush1.msra.mxu0 0.0
    %1629 = vmatprep.subr.mxu0 0.0
    %1630 = vmatpush1.msra.mxu0 0.0
    %1631 = vmatprep.subr.mxu0 0.0
    %1632 = vmatpush1.msra.mxu0 0.0
    %1633 = vmatprep.subr.mxu0 0.0
    %1634 = vmatpush1.msra.mxu0 0.0
    %1635 = vmatprep.subr.mxu0 0.0
    %1636 = vmatpush1.msra.mxu0 0.0
    %1637 = vmatprep.subr.mxu0 0.0
    %1638 = vmatpush1.msra.mxu0 0.0
    %1639 = vmatprep.subr.mxu0 0.0
    %1640 = vmatpush1.msra.mxu0 0.0
    %1641 = vmatprep.subr.mxu0 0.0
    %1642 = vmatpush1.msra.mxu0 0.0
    %1643 = vmatprep.subr.mxu0 0.0
    %1644 = vmatpush1.msra.mxu0 0.0
    %1645 = vmatprep.subr.mxu0 0.0
    %1646 = vmatpush1.msra.mxu0 0.0
    %1647 = vmatprep.subr.mxu0 0.0
    %1648 = vmatpush1.msra.mxu0 0.0
    %1649 = vmatprep.subr.mxu0 0.0
    %1650 = vmatpush1.msra.mxu0 0.0
    %1651 = vmatprep.subr.mxu0 0.0
    %1652 = vmatpush1.msra.mxu0 0.0
    %1653 = vmatprep.subr.mxu0 0.0
    %1654 = vmatpush1.msra.mxu0 0.0
    %1655 = vmatprep.subr.mxu0 0.0
    %1656 = vmatpush1.msra.mxu0 0.0
    %1657 = vmatprep.subr.mxu0 0.0
    %1658 = vmatpush1.msra.mxu0 0.0
    %1659 = vmatprep.subr.mxu0 0.0
    %1660 = vmatpush1.msra.mxu0 0.0
    %1661 = vmatprep.subr.mxu0 0.0
    %1662 = vmatpush1.msra.mxu0 0.0
    %1663 = vmatprep.subr.mxu0 0.0
    %1664 = vmatpush1.msra.mxu0 0.0
    %1665 = vmatprep.subr.mxu0 0.0
    %1666 = vmatpush1.msra.mxu0 0.0
    %1667 = vmatprep.subr.mxu0 0.0
    %1668 = vmatpush1.msra.mxu0 0.0
    %1669 = vmatprep.subr.mxu0 0.0
    %1670 = vmatpush1.msra.mxu0 0.0
    %1671 = vmatprep.subr.mxu0 0.0
    %1672 = vmatpush1.msra.mxu0 0.0
    %1673 = vmatprep.subr.mxu0 0.0
    %1674 = vmatpush1.msra.mxu0 0.0
    %1675 = vmatprep.subr.mxu0 0.0
    %1676 = vmatpush1.msra.mxu0 0.0
    %1677 = vmatprep.subr.mxu0 0.0
    %1678 = vmatpush1.msra.mxu0 0.0
    %1679 = vmatprep.subr.mxu0 0.0
    %1680 = vmatpush1.msra.mxu0 0.0
    %1681 = vmatprep.mubr.f32.mxu0 0.0
    %1682 = vmatmul.mubr.f32.gmra.mrb[0].mxu0 %v1615
    %v1683 = vpop.f32.mrb[0].mxu0
    %v1684 = vadd.f32 0.0, %v1683
    %v1685 = vpop.f32.mrb[0].mxu0
    %1686 = vdwg.mxu0
    %v1687 = vsub.f32 %v1684, %v1529
    %vm1688 = vcmp.gt.f32.partialorder %v1687, 1.0
    %v1689 = vsel %vm1688, 1, 0
    %v1690 = vcvt.s32.f32 %v1689
    %v1692 = vsel %vm488, %v1690, 0
    %1694 = vmatprep.subr.mxu0 0.0
    %1695 = vmatpush1.msra.mxu0 %v153
    %1696 = vmatprep.subr.mxu0 0.0
    %1697 = vmatpush1.msra.mxu0 %v154
    %1698 = vmatprep.subr.mxu0 0.0
    %1699 = vmatpush1.msra.mxu0 %v155
    %1700 = vmatprep.subr.mxu0 0.0
    %1701 = vmatpush1.msra.mxu0 %v156
    %1702 = vmatprep.subr.mxu0 0.0
    %1703 = vmatpush1.msra.mxu0 0.0
    %1704 = vmatprep.subr.mxu0 0.0
    %1705 = vmatpush1.msra.mxu0 0.0
    %1706 = vmatprep.subr.mxu0 0.0
    %1707 = vmatpush1.msra.mxu0 0.0
    %1708 = vmatprep.subr.mxu0 0.0
    %1709 = vmatpush1.msra.mxu0 0.0
    %1710 = vmatprep.subr.mxu0 0.0
    %1711 = vmatpush1.msra.mxu0 0.0
    %1712 = vmatprep.subr.mxu0 0.0
    %1713 = vmatpush1.msra.mxu0 0.0
    %1714 = vmatprep.subr.mxu0 0.0
    %1715 = vmatpush1.msra.mxu0 0.0
    %1716 = vmatprep.subr.mxu0 0.0
    %1717 = vmatpush1.msra.mxu0 0.0
    %1718 = vmatprep.subr.mxu0 0.0
    %1719 = vmatpush1.msra.mxu0 0.0
    %1720 = vmatprep.subr.mxu0 0.0
    %1721 = vmatpush1.msra.mxu0 0.0
    %1722 = vmatprep.subr.mxu0 0.0
    %1723 = vmatpush1.msra.mxu0 0.0
    %1724 = vmatprep.subr.mxu0 0.0
    %1725 = vmatpush1.msra.mxu0 0.0
    %1726 = vmatprep.subr.mxu0 0.0
    %1727 = vmatpush1.msra.mxu0 0.0
    %1728 = vmatprep.subr.mxu0 0.0
    %1729 = vmatpush1.msra.mxu0 0.0
    %1730 = vmatprep.subr.mxu0 0.0
    %1731 = vmatpush1.msra.mxu0 0.0
    %1732 = vmatprep.subr.mxu0 0.0
    %1733 = vmatpush1.msra.mxu0 0.0
    %1734 = vmatprep.subr.mxu0 0.0
    %1735 = vmatpush1.msra.mxu0 0.0
    %1736 = vmatprep.subr.mxu0 0.0
    %1737 = vmatpush1.msra.mxu0 0.0
    %1738 = vmatprep.subr.mxu0 0.0
    %1739 = vmatpush1.msra.mxu0 0.0
    %1740 = vmatprep.subr.mxu0 0.0
    %1741 = vmatpush1.msra.mxu0 0.0
    %1742 = vmatprep.subr.mxu0 0.0
    %1743 = vmatpush1.msra.mxu0 0.0
    %1744 = vmatprep.subr.mxu0 0.0
    %1745 = vmatpush1.msra.mxu0 0.0
    %1746 = vmatprep.subr.mxu0 0.0
    %1747 = vmatpush1.msra.mxu0 0.0
    %1748 = vmatprep.subr.mxu0 0.0
    %1749 = vmatpush1.msra.mxu0 0.0
    %1750 = vmatprep.subr.mxu0 0.0
    %1751 = vmatpush1.msra.mxu0 0.0
    %1752 = vmatprep.subr.mxu0 0.0
    %1753 = vmatpush1.msra.mxu0 0.0
    %1754 = vmatprep.subr.mxu0 0.0
    %1755 = vmatpush1.msra.mxu0 0.0
    %1756 = vmatprep.subr.mxu0 0.0
    %1757 = vmatpush1.msra.mxu0 0.0
    %1758 = vmatprep.mubr.f32.mxu0 0.0
    %1759 = vmatmul.mubr.f32.gmra.mrb[0].mxu0 %v1692
    %v1760 = vpop.f32.mrb[0].mxu0
    %v1761 = vadd.f32 0.0, %v1760
    %v1762 = vpop.f32.mrb[0].mxu0
    %1763 = vdwg.mxu0
    %v1764 = vsub.f32 %v1761, %v1606
    %vm1765 = vcmp.gt.f32.partialorder %v1764, 1.0
    %v1766 = vsel %vm1765, 1, 0
    %v1767 = vcvt.s32.f32 %v1766
    %1769 = vrot.lane.b32.xlu0 %v803, 16
    %v1770 = vpop.permute.xlu0 %1769
    %1773 = vrot.lane.b32.xlu0 %v964, 32
    %v1774 = vpop.permute.xlu0 %1773
    %1777 = vrot.lane.b32.xlu0 %v1125, 48
    %v1778 = vpop.permute.xlu0 %1777
    %1781 = vrot.lane.b32.xlu0 %v1284, 64
    %v1782 = vpop.permute.xlu0 %1781
    %1785 = vrot.lane.b32.xlu0 %v1445, 80
    %v1786 = vpop.permute.xlu0 %1785
    %1789 = vrot.lane.b32.xlu0 %v1606, 96
    %v1790 = vpop.permute.xlu0 %1789
    %1793 = vrot.lane.b32.xlu0 %v1767, 112
    %v1794 = vpop.permute.xlu0 %1793
    %vm1796 = vcmask 130048
    %v1797 = vsel %vm1796, %v642, %v1770
    %v1798 = vsel %vm488, %v1797, %v1774
    %vm1799 = vcmask 392192
    %v1800 = vsel %vm1799, %v1798, %v1778
    %vm1801 = vcmask 523264
    %v1802 = vsel %vm1801, %v1800, %v1782
    %vm1803 = vcmask 654336
    %v1804 = vsel %vm1803, %v1802, %v1786
    %vm1805 = vcmask 785408
    %v1806 = vsel %vm1805, %v1804, %v1790
    %vm1807 = vcmask 916480
    %v1808 = vsel %vm1807, %v1806, %v1794
    %1809 = vst [vmem:[#allocation2] sm:$0x3] %v1808
    %1811 = vrot.lane.b32.xlu0 %v800, 16
    %v1812 = vpop.permute.xlu0 %1811
    %1815 = vrot.lane.b32.xlu0 %v961, 32
    %v1816 = vpop.permute.xlu0 %1815
    %1819 = vrot.lane.b32.xlu0 %v1122, 48
    %v1820 = vpop.permute.xlu0 %1819
    %1823 = vrot.lane.b32.xlu0 %v1281, 64
    %v1824 = vpop.permute.xlu0 %1823
    %1827 = vrot.lane.b32.xlu0 %v1442, 80
    %v1828 = vpop.permute.xlu0 %1827
    %1831 = vrot.lane.b32.xlu0 %v1603, 96
    %v1832 = vpop.permute.xlu0 %1831
    %1835 = vrot.lane.b32.xlu0 %v1764, 112
    %v1836 = vpop.permute.xlu0 %1835
    %v1838 = vsel %vm1796, %v639, %v1812
    %v1839 = vsel %vm488, %v1838, %v1816
    %v1840 = vsel %vm1799, %v1839, %v1820
    %v1841 = vsel %vm1801, %v1840, %v1824
    %v1842 = vsel %vm1803, %v1841, %v1828
    %v1843 = vsel %vm1805, %v1842, %v1832
    %v1844 = vsel %vm1807, %v1843, %v1836
    %1845 = vst [vmem:[#allocation4] sm:$0x3] %v1844
    // Predicated region
    $region18: #{tpu_custom_call.1} parent=1 // pred_check
      _
    $region19: #{tpu_custom_call.1} parent=1 // pred_check_branch
      %1847 = sbr.rel (0) target = $region21
    $region20: #{tpu_custom_call.1} parent=1 // pred_region
      %s1849 = ssub.s32 32, 32
      %1850 = vsyncadd [#allocation3], %s1849
      %s1852 = sshll.u32 [#allocation2], 4
      %s1853 = int_to_ptr.vmem [resolvable:$true] %s1852
      %1855 = dma.vmem_to_hbm [thread:$0]  %s1853, 32, %s4, [#allocation3]
    $region21: #{tpu_custom_call.1} parent=1 // pred_fallthru
      _
    // Predicated region
    $region22: #{tpu_custom_call.1} parent=1 // pred_check
      _
    $region23: #{tpu_custom_call.1} parent=1 // pred_check_branch
      %1857 = sbr.rel (0) target = $region25
    $region24: #{tpu_custom_call.1} parent=1 // pred_region
      %s1859 = ssub.s32 32, 32
      %1860 = vsyncadd [#allocation5], %s1859
      %s1862 = sshll.u32 [#allocation4], 4
      %s1863 = int_to_ptr.vmem [resolvable:$true] %s1862
      %1865 = dma.vmem_to_hbm [thread:$0]  %s1863, 32, %s5, [#allocation5]
    $region25: #{tpu_custom_call.1} parent=1 // pred_fallthru
      _
    // Predicated region
    $region26: #{tpu_custom_call.1} parent=1 // pred_check
      _
    $region27: #{tpu_custom_call.1} parent=1 // pred_check_branch
      %1867 = sbr.rel (0) target = $region29
    $region28: #{tpu_custom_call.1} parent=1 // pred_region
      %1868 = dma.done [#allocation3], 32
    $region29: #{tpu_custom_call.1} parent=1 // pred_fallthru
      _
    // Predicated region
    $region30: #{tpu_custom_call.1} parent=1 // pred_check
      _
    $region31: #{tpu_custom_call.1} parent=1 // pred_check_branch
      %1870 = sbr.rel (0) target = $region33
    $region32: #{tpu_custom_call.1} parent=1 // pred_region
      %1871 = dma.done [#allocation5], 32
    $region33: #{tpu_custom_call.1} parent=1 // pred_fallthru
      _
    %1872 = vsyncpa [#allocation3], 1
    %1873 = vsyncpa [#allocation5], 1

</llo_original>
